<compile_context>
chip_gen: v6e
topology: v6e:2x2x1
jax: 0.10.0
libtpu: 0.0.40
codegen_flags: <defaults>
</compile_context>

<pallas_src>
import jax
import jax.numpy as jnp
from jax.experimental import pallas as pl
from jax.experimental.pallas import tpu as pltpu


def _round_up(x, m):
    return (x + m - 1) // m * m


def _update_node_feats_kernel(
    nf_ref,      # (TN, H)   node_feats row tile (also the GRU hidden state)
    intra_ref,   # (TN, H)
    inter_ref,   # (TN, H)
    wp_ref,      # (3, H, H) project_node Linear weight, transposed, split over
                 #           the three concat blocks (nf / intra / inter)
    bp_ref,      # (1, H)
    wih_ref,     # (H, 3H)   GRU weight_ih, transposed (gate order: r, z, n)
    bih_ref,     # (1, 3H)
    whh_ref,     # (H, 3H)   GRU weight_hh, transposed
    bhh_ref,     # (1, 3H)
    scale_ref,   # (1, H)    folded BN scale = gamma * rsqrt(var + eps)
    shift_ref,   # (1, H)    folded BN shift = beta - mean * scale
    o_ref,       # (TN, H)
):
    H = nf_ref.shape[1]
    h = nf_ref[...]

    # --- project_node: Dropout(eval)=identity -> Linear -> LeakyReLU(0.01) ---
    # Linear over the virtual concat, computed as three accumulating dots so
    # the concat is never materialized and node_feats is read only once.
    p = jnp.dot(h, wp_ref[0], preferred_element_type=jnp.float32)
    p = p + jnp.dot(intra_ref[...], wp_ref[1], preferred_element_type=jnp.float32)
    p = p + jnp.dot(inter_ref[...], wp_ref[2], preferred_element_type=jnp.float32)
    p = p + bp_ref[...]
    p = jnp.where(p > 0, p, 0.01 * p)

    # --- GRUCell (PyTorch gate order r, z, n) ---
    # gx / gh are kept as two K=H matmuls (not fused into one K=2H matmul)
    # because the n-gate applies r only to the hidden contribution:
    #   n = tanh(gx_n + r * gh_n)
    gx = jnp.dot(p, wih_ref[...], preferred_element_type=jnp.float32) + bih_ref[...]
    gh = jnp.dot(h, whh_ref[...], preferred_element_type=jnp.float32) + bhh_ref[...]

    r = jax.nn.sigmoid(gx[:, 0 * H:1 * H] + gh[:, 0 * H:1 * H])
    z = jax.nn.sigmoid(gx[:, 1 * H:2 * H] + gh[:, 1 * H:2 * H])
    n = jnp.tanh(gx[:, 2 * H:3 * H] + r * gh[:, 2 * H:3 * H])
    h_new = (1.0 - z) * n + z * h

    # --- ReLU + BatchNorm1d (eval), BN pre-folded to scale/shift ---
    y = jnp.maximum(h_new, 0.0)
    o_ref[...] = y * scale_ref[...] + shift_ref[...]


def update_node_feats_forward(node_feats, intra_m, inter_m, params, *, tile_n=128):
    """Wrapper: parameter folding / padding only; the hot path is the kernel."""
    N, H = node_feats.shape
    wp, bp, wih, bih, whh, bhh, gamma, beta, rmean, rvar = params
    assert wp.shape == (3 * H, H), "project weight must be (3H, H) transposed"

    # Split the projection weight over the three concat blocks.
    wp_stacked = wp.reshape(3, H, H)

    # Fold BatchNorm1d (eval mode, eps=1e-5) into a per-channel scale/shift.
    eps = 1e-5
    inv_std = jax.lax.rsqrt(rvar + eps)
    bn_scale = (gamma * inv_std).reshape(1, H)
    bn_shift = (beta - rmean * gamma * inv_std).reshape(1, H)

    # Row tiling: multiple of 8 (f32 sublane); pad N up to a whole tile.
    tile_n = _round_up(max(8, min(tile_n, _round_up(N, 8))), 8)
    n_pad = _round_up(N, tile_n)
    if n_pad != N:
        pad = [(0, n_pad - N), (0, 0)]
        nf_p = jnp.pad(node_feats, pad)
        intra_p = jnp.pad(intra_m, pad)
        inter_p = jnp.pad(inter_m, pad)
    else:
        nf_p, intra_p, inter_p = node_feats, intra_m, inter_m

    grid = (n_pad // tile_n,)

    # Activation / output tiles march down the row axis.
    row_spec = pl.BlockSpec((tile_n, H), lambda i: (i, 0))

    # Weights / params: full-array blocks, constant index_map -> VMEM-resident
    # across the whole grid. Rank is bound via a default arg (no late binding).
    def full_spec(shape):
        nd = len(shape)
        return pl.BlockSpec(shape, lambda i, _nd=nd: (0,) * _nd)

    args = (
        nf_p, intra_p, inter_p,
        wp_stacked, bp.reshape(1, H),
        wih, bih.reshape(1, 3 * H),
        whh, bhh.reshape(1, 3 * H),
        bn_scale, bn_shift,
    )
    in_specs = [
        row_spec, row_spec, row_spec,
        full_spec(wp_stacked.shape), full_spec((1, H)),
        full_spec(wih.shape), full_spec((1, 3 * H)),
        full_spec(whh.shape), full_spec((1, 3 * H)),
        full_spec((1, H)), full_spec((1, H)),
    ]

    out = pl.pallas_call(
        _update_node_feats_kernel,
        out_shape=jax.ShapeDtypeStruct((n_pad, H), jnp.float32),
        grid=grid,
        in_specs=in_specs,
        out_specs=row_spec,
        compiler_params=pltpu.CompilerParams(
            dimension_semantics=("parallel",)),
    )(*args)

    return out[:N] if n_pad != N else out


def init_params(key, in_dim, out_dim):
    """Deterministic synthetic parameters (shapes match the nn.Module)."""
    H = out_dim
    ks = jax.random.split(key, 8)
    scale = 0.1
    # project_node Linear(in_dim, out_dim) -> stored transposed (in_dim, H)
    wp = scale * jax.random.normal(ks[0], (in_dim, H), jnp.float32)
    bp = scale * jax.random.normal(ks[1], (H,), jnp.float32)
    # GRUCell(out_dim, out_dim): weight_ih (3H, H) -> transposed (H, 3H)
    wih = scale * jax.random.normal(ks[2], (H, 3 * H), jnp.float32)
    bih = scale * jax.random.normal(ks[3], (3 * H,), jnp.float32)
    whh = scale * jax.random.normal(ks[4], (H, 3 * H), jnp.float32)
    bhh = scale * jax.random.normal(ks[5], (3 * H,), jnp.float32)
    # BatchNorm1d(out_dim): affine + running stats (eval mode)
    gamma = 1.0 + scale * jax.random.normal(ks[6], (H,), jnp.float32)
    beta = scale * jax.random.normal(ks[7], (H,), jnp.float32)
    rmean = 0.05 * jnp.ones((H,), jnp.float32)
    rvar = jnp.ones((H,), jnp.float32) + 0.1
    return (wp, bp, wih, bih, whh, bhh, gamma, beta, rmean, rvar)


if __name__ == "__main__":
    # Small shapes consistent with the module: N graph nodes, out_dim hidden,
    # intra/inter messages same width as node_feats => in_dim = 3 * out_dim.
    # H = 128 keeps the GRU gate slices and the output store 128-lane dense;
    # N = 200 exercises the row-tiling + padding path (tile_n = 128, grid = 2).
    N, H = 200, 128
    in_dim = 3 * H

    key = jax.random.PRNGKey(0)
    k1, k2, k3, kp = jax.random.split(key, 4)
    node_feats = jax.random.normal(k1, (N, H), jnp.float32)
    intra_m = jax.random.normal(k2, (N, H), jnp.float32)
    inter_m = jax.random.normal(k3, (N, H), jnp.float32)

    params = init_params(kp, in_dim, H)

    out = update_node_feats_forward(node_feats, intra_m, inter_m, params)
    out = jax.block_until_ready(out)

    # Pure-JAX reference of the same (eval-mode) semantics.
    wp, bp, wih, bih, whh, bhh, gamma, beta, rmean, rvar = params
    x = jnp.concatenate([node_feats, intra_m, inter_m], axis=1)
    p = x @ wp + bp
    p = jnp.where(p > 0, p, 0.01 * p)
    gx = p @ wih + bih
    gh = node_feats @ whh + bhh
    r = jax.nn.sigmoid(gx[:, :H] + gh[:, :H])
    z = jax.nn.sigmoid(gx[:, H:2 * H] + gh[:, H:2 * H])
    n = jnp.tanh(gx[:, 2 * H:] + r * gh[:, 2 * H:])
    h_new = (1 - z) * n + z * node_feats
    y = jnp.maximum(h_new, 0.0)
    ref = (y - rmean) * jax.lax.rsqrt(rvar + 1e-5) * gamma + beta

    assert out.shape == (N, H)
    assert jnp.allclose(out, ref, atol=1e-4, rtol=1e-4), "mismatch vs reference"
    print("KERNEL_OK")
</pallas_src>

<mosaic_0001>
module attributes {stable_mosaic.version = 11 : i64} {
  func.func @_update_node_feats_kernel(%arg0: i32, %arg1: memref<128x128xf32, #tpu.memory_space<vmem>>, %arg2: memref<128x128xf32, #tpu.memory_space<vmem>>, %arg3: memref<128x128xf32, #tpu.memory_space<vmem>>, %arg4: memref<3x128x128xf32, #tpu.memory_space<vmem>>, %arg5: memref<1x128xf32, #tpu.memory_space<vmem>>, %arg6: memref<128x384xf32, #tpu.memory_space<vmem>>, %arg7: memref<1x384xf32, #tpu.memory_space<vmem>>, %arg8: memref<128x384xf32, #tpu.memory_space<vmem>>, %arg9: memref<1x384xf32, #tpu.memory_space<vmem>>, %arg10: memref<1x128xf32, #tpu.memory_space<vmem>>, %arg11: memref<1x128xf32, #tpu.memory_space<vmem>>, %arg12: memref<128x128xf32, #tpu.memory_space<vmem>>) attributes {dimension_semantics = [#tpu.dimension_semantics<parallel>], iteration_bounds = array<i64: 2>, scalar_prefetch = 0 : i64, scratch_operands = 0 : i64, tpu.core_type = #tpu.core_type<tc>, window_params = [{transform_indices = @transform_0, window_bounds = array<i64: 128, 128>}, {transform_indices = @transform_1, window_bounds = array<i64: 128, 128>}, {transform_indices = @transform_2, window_bounds = array<i64: 128, 128>}, {pipeline_mode = #tpu.pipeline_mode<synchronous>, transform_indices = @transform_3, window_bounds = array<i64: 3, 128, 128>}, {pipeline_mode = #tpu.pipeline_mode<synchronous>, transform_indices = @transform_4, window_bounds = array<i64: 1, 128>}, {pipeline_mode = #tpu.pipeline_mode<synchronous>, transform_indices = @transform_5, window_bounds = array<i64: 128, 384>}, {pipeline_mode = #tpu.pipeline_mode<synchronous>, transform_indices = @transform_6, window_bounds = array<i64: 1, 384>}, {pipeline_mode = #tpu.pipeline_mode<synchronous>, transform_indices = @transform_7, window_bounds = array<i64: 128, 384>}, {pipeline_mode = #tpu.pipeline_mode<synchronous>, transform_indices = @transform_8, window_bounds = array<i64: 1, 384>}, {pipeline_mode = #tpu.pipeline_mode<synchronous>, transform_indices = @transform_9, window_bounds = array<i64: 1, 128>}, {pipeline_mode = #tpu.pipeline_mode<synchronous>, transform_indices = @transform_10, window_bounds = array<i64: 1, 128>}, {transform_indices = @transform_11, window_bounds = array<i64: 128, 128>}]} {
    %c0 = arith.constant 0 : index
    %c0_0 = arith.constant 0 : index
    %0 = vector.load %arg1[%c0, %c0_0] : memref<128x128xf32, #tpu.memory_space<vmem>>, vector<128x128xf32>
    %c0_1 = arith.constant 0 : index
    %c0_2 = arith.constant 0 : index
    %c0_3 = arith.constant 0 : index
    %1 = vector.load %arg4[%c0_1, %c0_2, %c0_3] : memref<3x128x128xf32, #tpu.memory_space<vmem>>, vector<1x128x128xf32>
    %2 = vector.shape_cast %1 : vector<1x128x128xf32> to vector<128x128xf32>
    %cst = arith.constant dense<0.000000e+00> : vector<128x128xf32>
    %3 = tpu.matmul %0, %2, %cst {dimension_numbers = #tpu.dot_dimension_numbers<[1], [0], [0], [1], [0, 0, 1, 1], [], []>} : vector<128x128xf32>, vector<128x128xf32>, vector<128x128xf32> -> vector<128x128xf32>
    %c0_4 = arith.constant 0 : index
    %c0_5 = arith.constant 0 : index
    %4 = vector.load %arg2[%c0_4, %c0_5] : memref<128x128xf32, #tpu.memory_space<vmem>>, vector<128x128xf32>
    %c1 = arith.constant 1 : index
    %c0_6 = arith.constant 0 : index
    %c0_7 = arith.constant 0 : index
    %5 = vector.load %arg4[%c1, %c0_6, %c0_7] : memref<3x128x128xf32, #tpu.memory_space<vmem>>, vector<1x128x128xf32>
    %6 = vector.shape_cast %5 : vector<1x128x128xf32> to vector<128x128xf32>
    %cst_8 = arith.constant dense<0.000000e+00> : vector<128x128xf32>
    %7 = tpu.matmul %4, %6, %cst_8 {dimension_numbers = #tpu.dot_dimension_numbers<[1], [0], [0], [1], [0, 0, 1, 1], [], []>} : vector<128x128xf32>, vector<128x128xf32>, vector<128x128xf32> -> vector<128x128xf32>
    %8 = arith.addf %3, %7 : vector<128x128xf32>
    %c0_9 = arith.constant 0 : index
    %c0_10 = arith.constant 0 : index
    %9 = vector.load %arg3[%c0_9, %c0_10] : memref<128x128xf32, #tpu.memory_space<vmem>>, vector<128x128xf32>
    %c2 = arith.constant 2 : index
    %c0_11 = arith.constant 0 : index
    %c0_12 = arith.constant 0 : index
    %10 = vector.load %arg4[%c2, %c0_11, %c0_12] : memref<3x128x128xf32, #tpu.memory_space<vmem>>, vector<1x128x128xf32>
    %11 = vector.shape_cast %10 : vector<1x128x128xf32> to vector<128x128xf32>
    %cst_13 = arith.constant dense<0.000000e+00> : vector<128x128xf32>
    %12 = tpu.matmul %9, %11, %cst_13 {dimension_numbers = #tpu.dot_dimension_numbers<[1], [0], [0], [1], [0, 0, 1, 1], [], []>} : vector<128x128xf32>, vector<128x128xf32>, vector<128x128xf32> -> vector<128x128xf32>
    %13 = arith.addf %8, %12 : vector<128x128xf32>
    %c0_14 = arith.constant 0 : index
    %c0_15 = arith.constant 0 : index
    %14 = vector.load %arg5[%c0_14, %c0_15] : memref<1x128xf32, #tpu.memory_space<vmem>>, vector<1x128xf32>
    %15 = vector.broadcast %14 : vector<1x128xf32> to vector<128x128xf32>
    %16 = arith.addf %13, %15 : vector<128x128xf32>
    %cst_16 = arith.constant 0.000000e+00 : f32
    %17 = vector.broadcast %cst_16 : f32 to vector<128x128xf32>
    %18 = arith.cmpf ogt, %16, %17 : vector<128x128xf32>
    %cst_17 = arith.constant 0.00999999977 : f32
    %19 = vector.broadcast %cst_17 : f32 to vector<128x128xf32>
    %20 = arith.mulf %19, %16 : vector<128x128xf32>
    %21 = arith.select %18, %16, %20 : vector<128x128xi1>, vector<128x128xf32>
    %c0_18 = arith.constant 0 : index
    %c0_19 = arith.constant 0 : index
    %22 = vector.load %arg6[%c0_18, %c0_19] : memref<128x384xf32, #tpu.memory_space<vmem>>, vector<128x384xf32>
    %cst_20 = arith.constant dense<0.000000e+00> : vector<128x384xf32>
    %23 = tpu.matmul %21, %22, %cst_20 {dimension_numbers = #tpu.dot_dimension_numbers<[1], [0], [0], [1], [0, 0, 1, 1], [], []>} : vector<128x128xf32>, vector<128x384xf32>, vector<128x384xf32> -> vector<128x384xf32>
    %c0_21 = arith.constant 0 : index
    %c0_22 = arith.constant 0 : index
    %24 = vector.load %arg7[%c0_21, %c0_22] : memref<1x384xf32, #tpu.memory_space<vmem>>, vector<1x384xf32>
    %25 = vector.broadcast %24 : vector<1x384xf32> to vector<128x384xf32>
    %26 = arith.addf %23, %25 : vector<128x384xf32>
    %c0_23 = arith.constant 0 : index
    %c0_24 = arith.constant 0 : index
    %27 = vector.load %arg8[%c0_23, %c0_24] : memref<128x384xf32, #tpu.memory_space<vmem>>, vector<128x384xf32>
    %cst_25 = arith.constant dense<0.000000e+00> : vector<128x384xf32>
    %28 = tpu.matmul %0, %27, %cst_25 {dimension_numbers = #tpu.dot_dimension_numbers<[1], [0], [0], [1], [0, 0, 1, 1], [], []>} : vector<128x128xf32>, vector<128x384xf32>, vector<128x384xf32> -> vector<128x384xf32>
    %c0_26 = arith.constant 0 : index
    %c0_27 = arith.constant 0 : index
    %29 = vector.load %arg9[%c0_26, %c0_27] : memref<1x384xf32, #tpu.memory_space<vmem>>, vector<1x384xf32>
    %30 = vector.broadcast %29 : vector<1x384xf32> to vector<128x384xf32>
    %31 = arith.addf %28, %30 : vector<128x384xf32>
    %32 = vector.extract_strided_slice %26 {offsets = [0, 0], sizes = [128, 128], strides = [1, 1]} : vector<128x384xf32> to vector<128x128xf32>
    %33 = vector.extract_strided_slice %31 {offsets = [0, 0], sizes = [128, 128], strides = [1, 1]} : vector<128x384xf32> to vector<128x128xf32>
    %34 = arith.addf %32, %33 : vector<128x128xf32>
    %35 = arith.negf %34 : vector<128x128xf32>
    %36 = math.exp %35 : vector<128x128xf32>
    %cst_28 = arith.constant 1.000000e+00 : f32
    %37 = vector.broadcast %cst_28 : f32 to vector<128x128xf32>
    %38 = arith.addf %37, %36 : vector<128x128xf32>
    %39 = arith.divf %37, %38 : vector<128x128xf32>
    %40 = vector.extract_strided_slice %26 {offsets = [0, 128], sizes = [128, 128], strides = [1, 1]} : vector<128x384xf32> to vector<128x128xf32>
    %41 = vector.extract_strided_slice %31 {offsets = [0, 128], sizes = [128, 128], strides = [1, 1]} : vector<128x384xf32> to vector<128x128xf32>
    %42 = arith.addf %40, %41 : vector<128x128xf32>
    %43 = arith.negf %42 : vector<128x128xf32>
    %44 = math.exp %43 : vector<128x128xf32>
    %cst_29 = arith.constant 1.000000e+00 : f32
    %45 = vector.broadcast %cst_29 : f32 to vector<128x128xf32>
    %46 = arith.addf %45, %44 : vector<128x128xf32>
    %47 = arith.divf %45, %46 : vector<128x128xf32>
    %48 = vector.extract_strided_slice %26 {offsets = [0, 256], sizes = [128, 128], strides = [1, 1]} : vector<128x384xf32> to vector<128x128xf32>
    %49 = vector.extract_strided_slice %31 {offsets = [0, 256], sizes = [128, 128], strides = [1, 1]} : vector<128x384xf32> to vector<128x128xf32>
    %50 = arith.mulf %39, %49 : vector<128x128xf32>
    %51 = arith.addf %48, %50 : vector<128x128xf32>
    %52 = math.tanh %51 : vector<128x128xf32>
    %cst_30 = arith.constant 1.000000e+00 : f32
    %53 = vector.broadcast %cst_30 : f32 to vector<128x128xf32>
    %54 = arith.subf %53, %47 : vector<128x128xf32>
    %55 = arith.mulf %54, %52 : vector<128x128xf32>
    %56 = arith.mulf %47, %0 : vector<128x128xf32>
    %57 = arith.addf %55, %56 : vector<128x128xf32>
    %cst_31 = arith.constant 0.000000e+00 : f32
    %58 = vector.broadcast %cst_31 : f32 to vector<128x128xf32>
    %59 = arith.maximumf %57, %58 : vector<128x128xf32>
    %c0_32 = arith.constant 0 : index
    %c0_33 = arith.constant 0 : index
    %60 = vector.load %arg10[%c0_32, %c0_33] : memref<1x128xf32, #tpu.memory_space<vmem>>, vector<1x128xf32>
    %61 = vector.broadcast %60 : vector<1x128xf32> to vector<128x128xf32>
    %62 = arith.mulf %59, %61 : vector<128x128xf32>
    %c0_34 = arith.constant 0 : index
    %c0_35 = arith.constant 0 : index
    %63 = vector.load %arg11[%c0_34, %c0_35] : memref<1x128xf32, #tpu.memory_space<vmem>>, vector<1x128xf32>
    %64 = vector.broadcast %63 : vector<1x128xf32> to vector<128x128xf32>
    %65 = arith.addf %62, %64 : vector<128x128xf32>
    %c0_36 = arith.constant 0 : index
    %c0_37 = arith.constant 0 : index
    %66 = vector.load %arg12[%c0_36, %c0_37] : memref<128x128xf32, #tpu.memory_space<vmem>>, vector<128x128xf32>
    tpu.vector_store %arg12[%c0_36, %c0_37], %65 {strides = array<i32>} : memref<128x128xf32, #tpu.memory_space<vmem>>, vector<128x128xf32>,
    return
  }
  func.func @transform_0(%arg0: i32) -> (i32, i32) {
    %c0_i32 = arith.constant 0 : i32
    %c0_i32_0 = arith.constant 0 : i32
    return %arg0, %c0_i32 : i32, i32
  }
  func.func @transform_1(%arg0: i32) -> (i32, i32) {
    %c0_i32 = arith.constant 0 : i32
    %c0_i32_0 = arith.constant 0 : i32
    return %arg0, %c0_i32 : i32, i32
  }
  func.func @transform_2(%arg0: i32) -> (i32, i32) {
    %c0_i32 = arith.constant 0 : i32
    %c0_i32_0 = arith.constant 0 : i32
    return %arg0, %c0_i32 : i32, i32
  }
  func.func @transform_3(%arg0: i32) -> (i32, i32, i32) {
    %c0_i32 = arith.constant 0 : i32
    %c0_i32_0 = arith.constant 0 : i32
    %c0_i32_1 = arith.constant 0 : i32
    %c0_i32_2 = arith.constant 0 : i32
    return %c0_i32, %c0_i32_0, %c0_i32_1 : i32, i32, i32
  }
  func.func @transform_4(%arg0: i32) -> (i32, i32) {
    %c0_i32 = arith.constant 0 : i32
    %c0_i32_0 = arith.constant 0 : i32
    %c0_i32_1 = arith.constant 0 : i32
    return %c0_i32, %c0_i32_0 : i32, i32
  }
  func.func @transform_5(%arg0: i32) -> (i32, i32) {
    %c0_i32 = arith.constant 0 : i32
    %c0_i32_0 = arith.constant 0 : i32
    %c0_i32_1 = arith.constant 0 : i32
    return %c0_i32, %c0_i32_0 : i32, i32
  }
  func.func @transform_6(%arg0: i32) -> (i32, i32) {
    %c0_i32 = arith.constant 0 : i32
    %c0_i32_0 = arith.constant 0 : i32
    %c0_i32_1 = arith.constant 0 : i32
    return %c0_i32, %c0_i32_0 : i32, i32
  }
  func.func @transform_7(%arg0: i32) -> (i32, i32) {
    %c0_i32 = arith.constant 0 : i32
    %c0_i32_0 = arith.constant 0 : i32
    %c0_i32_1 = arith.constant 0 : i32
    return %c0_i32, %c0_i32_0 : i32, i32
  }
  func.func @transform_8(%arg0: i32) -> (i32, i32) {
    %c0_i32 = arith.constant 0 : i32
    %c0_i32_0 = arith.constant 0 : i32
    %c0_i32_1 = arith.constant 0 : i32
    return %c0_i32, %c0_i32_0 : i32, i32
  }
  func.func @transform_9(%arg0: i32) -> (i32, i32) {
    %c0_i32 = arith.constant 0 : i32
    %c0_i32_0 = arith.constant 0 : i32
    %c0_i32_1 = arith.constant 0 : i32
    return %c0_i32, %c0_i32_0 : i32, i32
  }
  func.func @transform_10(%arg0: i32) -> (i32, i32) {
    %c0_i32 = arith.constant 0 : i32
    %c0_i32_0 = arith.constant 0 : i32
    %c0_i32_1 = arith.constant 0 : i32
    return %c0_i32, %c0_i32_0 : i32, i32
  }
  func.func @transform_11(%arg0: i32) -> (i32, i32) {
    %c0_i32 = arith.constant 0 : i32
    %c0_i32_0 = arith.constant 0 : i32
    return %arg0, %c0_i32 : i32, i32
  }
}

</mosaic_0001>

<llo_original>
// kernel: tpu_custom_call.1
$region0: #{tpu_custom_call.1}
  #allocation0 [shape = 'u32[]', space=smem, size = 0x4, offset = 0x4, fixed_abs, tag = 'smem constant byte address 0x4 - core index']
  #allocation1 [shape = 'u32[144,128]{1,0:T(1,128)}', space=vmem, size = 0x12000, scoped, tag = 'internal scratch']
  %s0 = inlined_call_operand.hbm [shape: f32[256,128], index: 0, kind: input, shape index: {}]
  %s1 = inlined_call_operand.hbm [shape: f32[256,128], index: 1, kind: input, shape index: {}]
  %s2 = inlined_call_operand.hbm [shape: f32[256,128], index: 2, kind: input, shape index: {}]
  %s3 = inlined_call_operand.hbm [shape: f32[3,128,128], index: 3, kind: input, shape index: {}]
  %s4 = inlined_call_operand.vmem [shape: f32[1,128], index: 4, kind: input, shape index: {}]
  %s5 = inlined_call_operand.hbm [shape: f32[128,384], index: 5, kind: input, shape index: {}]
  %s6 = inlined_call_operand.vmem [shape: f32[1,384], index: 6, kind: input, shape index: {}]
  %s7 = inlined_call_operand.hbm [shape: f32[128,384], index: 7, kind: input, shape index: {}]
  %s8 = inlined_call_operand.vmem [shape: f32[1,384], index: 8, kind: input, shape index: {}]
  %s9 = inlined_call_operand.vmem [shape: f32[1,128], index: 9, kind: input, shape index: {}]
  %s10 = inlined_call_operand.vmem [shape: f32[1,128], index: 10, kind: input, shape index: {}]
  %s11 = inlined_call_operand.hbm [shape: f32[256,128], index: 11, kind: output, shape index: {}]
  %s12 = sld [smem:[#allocation0]]
  $region101: #{tpu_custom_call.1} parent=0
    _
  %s14 = ssub.s32 1, %s12
  %s15 = scalar_select 0, %s14, %s12
  $region1: #{tpu_custom_call.1} parent=0
    #allocation2 [shape = 'u8[131072]{0}', space=vmem, size = 0x20000, scoped, tag = 'input window, operand 0']
    #allocation3 [shape = 's32[2]{0}', space=sflag, size = 0x8, scoped, tag = 'scoped memory for tpu_custom_call.1']
    #allocation4 [shape = 's32[2]{0}', space=sflag, size = 0x8, scoped, tag = 'scoped memory for tpu_custom_call.1']
    #allocation5 [shape = 'u8[131072]{0}', space=vmem, size = 0x20000, scoped, tag = 'input window, operand 1']
    #allocation6 [shape = 's32[2]{0}', space=sflag, size = 0x8, scoped, tag = 'scoped memory for tpu_custom_call.1']
    #allocation7 [shape = 'u8[131072]{0}', space=vmem, size = 0x20000, scoped, tag = 'input window, operand 2']
    #allocation8 [shape = 'u8[196608]{0}', space=vmem, size = 0x30000, scoped, tag = 'input window, operand 3, single buffered']
    #allocation9 [shape = 's32[1]{0}', space=sflag, size = 0x4, scoped, tag = 'scoped memory for tpu_custom_call.1']
    #allocation10 [shape = 'u8[196608]{0}', space=vmem, size = 0x30000, scoped, tag = 'input window, operand 5, single buffered']
    #allocation11 [shape = 'u8[196608]{0}', space=vmem, size = 0x30000, scoped, tag = 'input window, operand 7, single buffered']
    #allocation12 [shape = 's32[1]{0}', space=sflag, size = 0x4, scoped, tag = 'scoped memory for tpu_custom_call.1']
    #allocation13 [shape = 'u8[131072]{0}', space=vmem, size = 0x20000, scoped, tag = 'output window, operand 0']
    %16 = vsyncpa [#allocation3], 0
    %s17 = scalar_lea.sflag [#allocation3], 1
    %18 = vsyncpa %s17, 0
    %19 = vsyncpa [#allocation6], 0
    %s20 = scalar_lea.sflag [#allocation6], 1
    %21 = vsyncpa %s20, 0
    %22 = vsyncpa [#allocation9], 0
    %23 = vsyncpa [#allocation12], 0
    %24 = vsyncpa [#allocation4], 0
    %s25 = scalar_lea.sflag [#allocation4], 1
    %26 = vsyncpa %s25, 0
    loop: start=0, step=1, limit=4
    $region2: #{tpu_custom_call.1} parent=1 // loop_pre_header
      _
    $region3: #{tpu_custom_call.1} parent=1 // loop_header
      %s28 = sphi 0, %s32
      %p29 = scmp.ge.s32.totalorder %s28, 4
      %s38 = sphi 0, %s40
      %s41 = sphi 0, %s38
      %s42 = sphi 0, %s41
      %s58 = sphi 0, %s42
      %s64 = sphi 0, %s66
      %s67 = sphi 0, %s64
      %s68 = sphi 0, %s67
      %s84 = sphi 0, %s68
      %s90 = sphi 0, %s92
      %s93 = sphi 0, %s90
      %s94 = sphi 0, %s93
      %s110 = sphi 0, %s94
      %s114 = sphi 0, %s114
      %s116 = sphi 0, %s114
      %s117 = sphi 0, %s116
      %s131 = sphi 0, %s117
      %s135 = sphi 0, %s135
      %s137 = sphi 0, %s135
      %s138 = sphi 0, %s137
      %s152 = sphi 0, %s138
      %s156 = sphi 0, %s156
      %s158 = sphi 0, %s156
      %s159 = sphi 0, %s158
      %s173 = sphi 0, %s159
      %s177 = sphi 0, %s177
      %s179 = sphi 0, %s177
      %s180 = sphi 0, %s179
      %s194 = sphi 0, %s180
      %s198 = sphi 0, %s198
      %s200 = sphi 0, %s198
      %s201 = sphi 0, %s200
      %s215 = sphi 0, %s201
      %s219 = sphi 0, %s219
      %s221 = sphi 0, %s219
      %s222 = sphi 0, %s221
      %s236 = sphi 0, %s222
      %s240 = sphi 0, %s240
      %s242 = sphi 0, %s240
      %s243 = sphi 0, %s242
      %s257 = sphi 0, %s243
      %s261 = sphi 0, %s261
      %s263 = sphi 0, %s261
      %s264 = sphi 0, %s263
      %s278 = sphi 0, %s264
      %s284 = sphi 0, %s286
      %s287 = sphi 0, %s284
      %s288 = sphi 0, %s287
      %s304 = sphi 0, %s288
    $region4: #{tpu_custom_call.1} parent=1 // loop_header_branch
      %31 = sbr.rel (%p29) target = $region8
    $region5: #{tpu_custom_call.1} parent=1 // loop_body
      %s33 = ssub.s32 %s28, 1
      %s34 = ssub.s32 %s28, 2
      %s35 = sadd.s32 %s28, 1
      %s36 = ssub.s32 %s28, %s35
      %p37 = scmp.eq.s32.totalorder %s36, 0
      %s39 = sadd.s32 %s38, 1
      %s40 = scalar_select %p37, %s38, %s39
      %p43 = pneg %p37
      %p44 = scmp.eq.s32.totalorder %s28, 1
      %p45 = por %p43, %p44
      %p46 = scmp.ne.s32.totalorder %s38, %s41
      %p47 = scmp.eq.s32.totalorder %s28, 0
      %p48 = por %p46, %p47
      %p49 = scmp.ne.s32.totalorder %s38, %s41
      %p50 = scmp.eq.s32.totalorder %s33, 1
      %p51 = por %p49, %p50
      %p52 = scmp.ne.s32.totalorder %s41, %s42
      %p53 = scmp.eq.s32.totalorder %s33, 0
      %p54 = por %p52, %p53
      %p55 = scmp.ne.s32.totalorder %s41, %s42
      %p56 = scmp.eq.s32.totalorder %s34, 1
      %p57 = por %p55, %p56
      %p59 = scmp.ne.s32.totalorder %s42, %s58
      %p60 = scmp.eq.s32.totalorder %s34, 0
      %p61 = por %p59, %p60
      %s62 = ssub.s32 %s28, %s35
      %p63 = scmp.eq.s32.totalorder %s62, 0
      %s65 = sadd.s32 %s64, 1
      %s66 = scalar_select %p63, %s64, %s65
      %p69 = pneg %p63
      %p70 = scmp.eq.s32.totalorder %s28, 1
      %p71 = por %p69, %p70
      %p72 = scmp.ne.s32.totalorder %s64, %s67
      %p73 = scmp.eq.s32.totalorder %s28, 0
      %p74 = por %p72, %p73
      %p75 = scmp.ne.s32.totalorder %s64, %s67
      %p76 = scmp.eq.s32.totalorder %s33, 1
      %p77 = por %p75, %p76
      %p78 = scmp.ne.s32.totalorder %s67, %s68
      %p79 = scmp.eq.s32.totalorder %s33, 0
      %p80 = por %p78, %p79
      %p81 = scmp.ne.s32.totalorder %s67, %s68
      %p82 = scmp.eq.s32.totalorder %s34, 1
      %p83 = por %p81, %p82
      %p85 = scmp.ne.s32.totalorder %s68, %s84
      %p86 = scmp.eq.s32.totalorder %s34, 0
      %p87 = por %p85, %p86
      %s88 = ssub.s32 %s28, %s35
      %p89 = scmp.eq.s32.totalorder %s88, 0
      %s91 = sadd.s32 %s90, 1
      %s92 = scalar_select %p89, %s90, %s91
      %p95 = pneg %p89
      %p96 = scmp.eq.s32.totalorder %s28, 1
      %p97 = por %p95, %p96
      %p98 = scmp.ne.s32.totalorder %s90, %s93
      %p99 = scmp.eq.s32.totalorder %s28, 0
      %p100 = por %p98, %p99
      %p101 = scmp.ne.s32.totalorder %s90, %s93
      %p102 = scmp.eq.s32.totalorder %s33, 1
      %p103 = por %p101, %p102
      %p104 = scmp.ne.s32.totalorder %s93, %s94
      %p105 = scmp.eq.s32.totalorder %s33, 0
      %p106 = por %p104, %p105
      %p107 = scmp.ne.s32.totalorder %s93, %s94
      %p108 = scmp.eq.s32.totalorder %s34, 1
      %p109 = por %p107, %p108
      %p111 = scmp.ne.s32.totalorder %s94, %s110
      %p112 = scmp.eq.s32.totalorder %s34, 0
      %p113 = por %p111, %p112
      %s115 = sadd.s32 %s114, 1
      %p118 = scmp.eq.s32.totalorder %s28, 1
      %p119 = scmp.ne.s32.totalorder %s114, %s116
      %p120 = scmp.eq.s32.totalorder %s28, 0
      %p121 = por %p119, %p120
      %p122 = scmp.ne.s32.totalorder %s114, %s116
      %p123 = scmp.eq.s32.totalorder %s33, 1
      %p124 = por %p122, %p123
      %p125 = scmp.ne.s32.totalorder %s116, %s117
      %p126 = scmp.eq.s32.totalorder %s33, 0
      %p127 = por %p125, %p126
      %p128 = scmp.ne.s32.totalorder %s116, %s117
      %p129 = scmp.eq.s32.totalorder %s34, 1
      %p130 = por %p128, %p129
      %p132 = scmp.ne.s32.totalorder %s117, %s131
      %p133 = scmp.eq.s32.totalorder %s34, 0
      %p134 = por %p132, %p133
      %s136 = sadd.s32 %s135, 1
      %p139 = scmp.eq.s32.totalorder %s28, 1
      %p140 = scmp.ne.s32.totalorder %s135, %s137
      %p141 = scmp.eq.s32.totalorder %s28, 0
      %p142 = por %p140, %p141
      %p143 = scmp.ne.s32.totalorder %s135, %s137
      %p144 = scmp.eq.s32.totalorder %s33, 1
      %p145 = por %p143, %p144
      %p146 = scmp.ne.s32.totalorder %s137, %s138
      %p147 = scmp.eq.s32.totalorder %s33, 0
      %p148 = por %p146, %p147
      %p149 = scmp.ne.s32.totalorder %s137, %s138
      %p150 = scmp.eq.s32.totalorder %s34, 1
      %p151 = por %p149, %p150
      %p153 = scmp.ne.s32.totalorder %s138, %s152
      %p154 = scmp.eq.s32.totalorder %s34, 0
      %p155 = por %p153, %p154
      %s157 = sadd.s32 %s156, 1
      %p160 = scmp.eq.s32.totalorder %s28, 1
      %p161 = scmp.ne.s32.totalorder %s156, %s158
      %p162 = scmp.eq.s32.totalorder %s28, 0
      %p163 = por %p161, %p162
      %p164 = scmp.ne.s32.totalorder %s156, %s158
      %p165 = scmp.eq.s32.totalorder %s33, 1
      %p166 = por %p164, %p165
      %p167 = scmp.ne.s32.totalorder %s158, %s159
      %p168 = scmp.eq.s32.totalorder %s33, 0
      %p169 = por %p167, %p168
      %p170 = scmp.ne.s32.totalorder %s158, %s159
      %p171 = scmp.eq.s32.totalorder %s34, 1
      %p172 = por %p170, %p171
      %p174 = scmp.ne.s32.totalorder %s159, %s173
      %p175 = scmp.eq.s32.totalorder %s34, 0
      %p176 = por %p174, %p175
      %s178 = sadd.s32 %s177, 1
      %p181 = scmp.eq.s32.totalorder %s28, 1
      %p182 = scmp.ne.s32.totalorder %s177, %s179
      %p183 = scmp.eq.s32.totalorder %s28, 0
      %p184 = por %p182, %p183
      %p185 = scmp.ne.s32.totalorder %s177, %s179
      %p186 = scmp.eq.s32.totalorder %s33, 1
      %p187 = por %p185, %p186
      %p188 = scmp.ne.s32.totalorder %s179, %s180
      %p189 = scmp.eq.s32.totalorder %s33, 0
      %p190 = por %p188, %p189
      %p191 = scmp.ne.s32.totalorder %s179, %s180
      %p192 = scmp.eq.s32.totalorder %s34, 1
      %p193 = por %p191, %p192
      %p195 = scmp.ne.s32.totalorder %s180, %s194
      %p196 = scmp.eq.s32.totalorder %s34, 0
      %p197 = por %p195, %p196
      %s199 = sadd.s32 %s198, 1
      %p202 = scmp.eq.s32.totalorder %s28, 1
      %p203 = scmp.ne.s32.totalorder %s198, %s200
      %p204 = scmp.eq.s32.totalorder %s28, 0
      %p205 = por %p203, %p204
      %p206 = scmp.ne.s32.totalorder %s198, %s200
      %p207 = scmp.eq.s32.totalorder %s33, 1
      %p208 = por %p206, %p207
      %p209 = scmp.ne.s32.totalorder %s200, %s201
      %p210 = scmp.eq.s32.totalorder %s33, 0
      %p211 = por %p209, %p210
      %p212 = scmp.ne.s32.totalorder %s200, %s201
      %p213 = scmp.eq.s32.totalorder %s34, 1
      %p214 = por %p212, %p213
      %p216 = scmp.ne.s32.totalorder %s201, %s215
      %p217 = scmp.eq.s32.totalorder %s34, 0
      %p218 = por %p216, %p217
      %s220 = sadd.s32 %s219, 1
      %p223 = scmp.eq.s32.totalorder %s28, 1
      %p224 = scmp.ne.s32.totalorder %s219, %s221
      %p225 = scmp.eq.s32.totalorder %s28, 0
      %p226 = por %p224, %p225
      %p227 = scmp.ne.s32.totalorder %s219, %s221
      %p228 = scmp.eq.s32.totalorder %s33, 1
      %p229 = por %p227, %p228
      %p230 = scmp.ne.s32.totalorder %s221, %s222
      %p231 = scmp.eq.s32.totalorder %s33, 0
      %p232 = por %p230, %p231
      %p233 = scmp.ne.s32.totalorder %s221, %s222
      %p234 = scmp.eq.s32.totalorder %s34, 1
      %p235 = por %p233, %p234
      %p237 = scmp.ne.s32.totalorder %s222, %s236
      %p238 = scmp.eq.s32.totalorder %s34, 0
      %p239 = por %p237, %p238
      %s241 = sadd.s32 %s240, 1
      %p244 = scmp.eq.s32.totalorder %s28, 1
      %p245 = scmp.ne.s32.totalorder %s240, %s242
      %p246 = scmp.eq.s32.totalorder %s28, 0
      %p247 = por %p245, %p246
      %p248 = scmp.ne.s32.totalorder %s240, %s242
      %p249 = scmp.eq.s32.totalorder %s33, 1
      %p250 = por %p248, %p249
      %p251 = scmp.ne.s32.totalorder %s242, %s243
      %p252 = scmp.eq.s32.totalorder %s33, 0
      %p253 = por %p251, %p252
      %p254 = scmp.ne.s32.totalorder %s242, %s243
      %p255 = scmp.eq.s32.totalorder %s34, 1
      %p256 = por %p254, %p255
      %p258 = scmp.ne.s32.totalorder %s243, %s257
      %p259 = scmp.eq.s32.totalorder %s34, 0
      %p260 = por %p258, %p259
      %s262 = sadd.s32 %s261, 1
      %p265 = scmp.eq.s32.totalorder %s28, 1
      %p266 = scmp.ne.s32.totalorder %s261, %s263
      %p267 = scmp.eq.s32.totalorder %s28, 0
      %p268 = por %p266, %p267
      %p269 = scmp.ne.s32.totalorder %s261, %s263
      %p270 = scmp.eq.s32.totalorder %s33, 1
      %p271 = por %p269, %p270
      %p272 = scmp.ne.s32.totalorder %s263, %s264
      %p273 = scmp.eq.s32.totalorder %s33, 0
      %p274 = por %p272, %p273
      %p275 = scmp.ne.s32.totalorder %s263, %s264
      %p276 = scmp.eq.s32.totalorder %s34, 1
      %p277 = por %p275, %p276
      %p279 = scmp.ne.s32.totalorder %s264, %s278
      %p280 = scmp.eq.s32.totalorder %s34, 0
      %p281 = por %p279, %p280
      %s282 = ssub.s32 %s28, %s35
      %p283 = scmp.eq.s32.totalorder %s282, 0
      %s285 = sadd.s32 %s284, 1
      %s286 = scalar_select %p283, %s284, %s285
      %p289 = pneg %p283
      %p290 = scmp.eq.s32.totalorder %s28, 1
      %p291 = por %p289, %p290
      %p292 = scmp.ne.s32.totalorder %s284, %s287
      %p293 = scmp.eq.s32.totalorder %s28, 0
      %p294 = por %p292, %p293
      %p295 = scmp.ne.s32.totalorder %s284, %s287
      %p296 = scmp.eq.s32.totalorder %s33, 1
      %p297 = por %p295, %p296
      %p298 = scmp.ne.s32.totalorder %s287, %s288
      %p299 = scmp.eq.s32.totalorder %s33, 0
      %p300 = por %p298, %p299
      %p301 = scmp.ne.s32.totalorder %s287, %s288
      %p302 = scmp.eq.s32.totalorder %s34, 1
      %p303 = por %p301, %p302
      %p305 = scmp.ne.s32.totalorder %s288, %s304
      %p306 = scmp.eq.s32.totalorder %s34, 0
      %p307 = por %p305, %p306
      %p308 = scmp.le.s32.totalorder 1, %s28
      %p309 = scmp.lt.s32.totalorder %s28, 3
      %p310 = pnand %p308, %p309
      %p311 = pneg %p310
      // Predicated region
      $region9: #{tpu_custom_call.1} parent=5 // pred_check
        _
      $region10: #{tpu_custom_call.1} parent=5 // pred_check_branch
        %313 = sbr.rel (%p310) target = $region12
      $region11: #{tpu_custom_call.1} parent=5 // pred_region
        %s314 = ssub.s32 %s28, 1
        // Predicated region
        $region13: #{tpu_custom_call.1} parent=11 // pred_check
          %p315 = pneg %p127
        $region14: #{tpu_custom_call.1} parent=11 // pred_check_branch
          %317 = sbr.rel (%p315) target = $region16
        $region15: #{tpu_custom_call.1} parent=11 // pred_region
          %s319 = ssub.s32 6144, 6144
          %320 = vsyncadd [#allocation9], %s319
          %s321 = sshll.u32 [#allocation8], 4
          %s322 = int_to_ptr.vmem [resolvable:$true] %s321
          %327 = dma.hbm_to_vmem [thread:$0]  %s3, 6144, %s322, [#allocation9], 128, 128, 8
        $region16: #{tpu_custom_call.1} parent=11 // pred_fallthru
          _
        // Predicated region
        $region17: #{tpu_custom_call.1} parent=11 // pred_check
          %p328 = pneg %p148
        $region18: #{tpu_custom_call.1} parent=11 // pred_check_branch
          %330 = sbr.rel (%p328) target = $region20
        $region19: #{tpu_custom_call.1} parent=11 // pred_region
          _
        $region20: #{tpu_custom_call.1} parent=11 // pred_fallthru
          _
        // Predicated region
        $region21: #{tpu_custom_call.1} parent=11 // pred_check
          %p331 = pneg %p169
        $region22: #{tpu_custom_call.1} parent=11 // pred_check_branch
          %333 = sbr.rel (%p331) target = $region24
        $region23: #{tpu_custom_call.1} parent=11 // pred_region
          %s335 = ssub.s32 6144, 6144
          %336 = vsyncadd [#allocation9], %s335
          %s337 = sshll.u32 [#allocation10], 4
          %s338 = int_to_ptr.vmem [resolvable:$true] %s337
          %343 = dma.hbm_to_vmem [thread:$0]  %s5, 6144, %s338, [#allocation9], 384, 384, 24
        $region24: #{tpu_custom_call.1} parent=11 // pred_fallthru
          _
        // Predicated region
        $region25: #{tpu_custom_call.1} parent=11 // pred_check
          %p344 = pneg %p190
        $region26: #{tpu_custom_call.1} parent=11 // pred_check_branch
          %346 = sbr.rel (%p344) target = $region28
        $region27: #{tpu_custom_call.1} parent=11 // pred_region
          _
        $region28: #{tpu_custom_call.1} parent=11 // pred_fallthru
          _
        // Predicated region
        $region29: #{tpu_custom_call.1} parent=11 // pred_check
          %p347 = pneg %p211
        $region30: #{tpu_custom_call.1} parent=11 // pred_check_branch
          %349 = sbr.rel (%p347) target = $region32
        $region31: #{tpu_custom_call.1} parent=11 // pred_region
          %s351 = ssub.s32 6144, 6144
          %352 = vsyncadd [#allocation12], %s351
          %s353 = sshll.u32 [#allocation11], 4
          %s354 = int_to_ptr.vmem [resolvable:$true] %s353
          %359 = dma.hbm_to_vmem [thread:$0]  %s7, 6144, %s354, [#allocation12], 384, 384, 24
        $region32: #{tpu_custom_call.1} parent=11 // pred_fallthru
          _
        // Predicated region
        $region33: #{tpu_custom_call.1} parent=11 // pred_check
          %p360 = pneg %p232
        $region34: #{tpu_custom_call.1} parent=11 // pred_check_branch
          %362 = sbr.rel (%p360) target = $region36
        $region35: #{tpu_custom_call.1} parent=11 // pred_region
          _
        $region36: #{tpu_custom_call.1} parent=11 // pred_fallthru
          _
        // Predicated region
        $region37: #{tpu_custom_call.1} parent=11 // pred_check
          %p363 = pneg %p253
        $region38: #{tpu_custom_call.1} parent=11 // pred_check_branch
          %365 = sbr.rel (%p363) target = $region40
        $region39: #{tpu_custom_call.1} parent=11 // pred_region
          _
        $region40: #{tpu_custom_call.1} parent=11 // pred_fallthru
          _
        // Predicated region
        $region41: #{tpu_custom_call.1} parent=11 // pred_check
          %p366 = pneg %p274
        $region42: #{tpu_custom_call.1} parent=11 // pred_check_branch
          %368 = sbr.rel (%p366) target = $region44
        $region43: #{tpu_custom_call.1} parent=11 // pred_region
          _
        $region44: #{tpu_custom_call.1} parent=11 // pred_fallthru
          _
      $region12: #{tpu_custom_call.1} parent=5 // pred_fallthru
        _
      %p369 = scmp.lt.s32.totalorder %s28, 2
      // Predicated region
      $region45: #{tpu_custom_call.1} parent=5 // pred_check
        %p370 = pneg %p369
      $region46: #{tpu_custom_call.1} parent=5 // pred_check_branch
        %372 = sbr.rel (%p370) target = $region48
      $region47: #{tpu_custom_call.1} parent=5 // pred_region
        // Predicated region
        $region49: #{tpu_custom_call.1} parent=47 // pred_check
          %p373 = pneg %p48
        $region50: #{tpu_custom_call.1} parent=47 // pred_check_branch
          %375 = sbr.rel (%p373) target = $region52
        $region51: #{tpu_custom_call.1} parent=47 // pred_region
          %s376 = sand.u32 %s38, 1
          %s377 = scalar_lea.sflag [#allocation3], %s376
          %s378 = sand.u32 %s38, 1
          %s379 = smul.addr %s378, 128
          %s380 = scalar_lea.vmem [#allocation2], %s379
          %s381 = smul.u32 16, %s28
          %s383 = ssub.s32 2048, 2048
          %384 = vsyncadd %s377, %s383
          %s385 = smul.addr %s381, 128
          %s386 = scalar_lea.hbm %s0, %s385
          %s387 = sshll.u32 %s380, 4
          %s388 = int_to_ptr.vmem [resolvable:$true] %s387
          %393 = dma.hbm_to_vmem [thread:$0]  %s386, 2048, %s388, %s377, 128, 128, 8
        $region52: #{tpu_custom_call.1} parent=47 // pred_fallthru
          _
        // Predicated region
        $region53: #{tpu_custom_call.1} parent=47 // pred_check
          %p394 = pneg %p74
        $region54: #{tpu_custom_call.1} parent=47 // pred_check_branch
          %396 = sbr.rel (%p394) target = $region56
        $region55: #{tpu_custom_call.1} parent=47 // pred_region
          %s397 = sand.u32 %s28, 1
          %s398 = scalar_lea.sflag [#allocation6], %s397
          %s399 = sand.u32 %s64, 1
          %s400 = smul.addr %s399, 128
          %s401 = scalar_lea.vmem [#allocation5], %s400
          %s402 = smul.u32 16, %s28
          %s404 = ssub.s32 2048, 2048
          %405 = vsyncadd %s398, %s404
          %s406 = smul.addr %s402, 128
          %s407 = scalar_lea.hbm %s1, %s406
          %s408 = sshll.u32 %s401, 4
          %s409 = int_to_ptr.vmem [resolvable:$true] %s408
          %414 = dma.hbm_to_vmem [thread:$0]  %s407, 2048, %s409, %s398, 128, 128, 8
        $region56: #{tpu_custom_call.1} parent=47 // pred_fallthru
          _
        // Predicated region
        $region57: #{tpu_custom_call.1} parent=47 // pred_check
          %p415 = pneg %p100
        $region58: #{tpu_custom_call.1} parent=47 // pred_check_branch
          %417 = sbr.rel (%p415) target = $region60
        $region59: #{tpu_custom_call.1} parent=47 // pred_region
          %s418 = sand.u32 %s28, 1
          %s419 = scalar_lea.sflag [#allocation6], %s418
          %s420 = sand.u32 %s90, 1
          %s421 = smul.addr %s420, 128
          %s422 = scalar_lea.vmem [#allocation7], %s421
          %s423 = smul.u32 16, %s28
          %s425 = ssub.s32 2048, 2048
          %426 = vsyncadd %s419, %s425
          %s427 = smul.addr %s423, 128
          %s428 = scalar_lea.hbm %s2, %s427
          %s429 = sshll.u32 %s422, 4
          %s430 = int_to_ptr.vmem [resolvable:$true] %s429
          %435 = dma.hbm_to_vmem [thread:$0]  %s428, 2048, %s430, %s419, 128, 128, 8
        $region60: #{tpu_custom_call.1} parent=47 // pred_fallthru
          _
      $region48: #{tpu_custom_call.1} parent=5 // pred_fallthru
        _
      %p436 = scmp.le.s32.totalorder 1, %s28
      %p437 = scmp.lt.s32.totalorder %s28, 3
      %p438 = pnand %p436, %p437
      %p439 = pneg %p438
      // Predicated region
      $region61: #{tpu_custom_call.1} parent=5 // pred_check
        _
      $region62: #{tpu_custom_call.1} parent=5 // pred_check_branch
        %441 = sbr.rel (%p438) target = $region64
      $region63: #{tpu_custom_call.1} parent=5 // pred_region
        %s442 = ssub.s32 %s28, 1
        %s443 = sand.u32 %s41, 1
        %s444 = scalar_lea.sflag [#allocation3], %s443
        %s445 = sand.u32 %s41, 1
        %s446 = smul.addr %s445, 128
        %s447 = scalar_lea.vmem [#allocation2], %s446
        // Predicated region
        $region65: #{tpu_custom_call.1} parent=63 // pred_check
          %p448 = pneg %p54
        $region66: #{tpu_custom_call.1} parent=63 // pred_check_branch
          %450 = sbr.rel (%p448) target = $region68
        $region67: #{tpu_custom_call.1} parent=63 // pred_region
          %451 = dma.done %s444, 2048
        $region68: #{tpu_custom_call.1} parent=63 // pred_fallthru
          _
        %s452 = sand.u32 %s33, 1
        %s453 = scalar_lea.sflag [#allocation6], %s452
        %s454 = sand.u32 %s67, 1
        %s455 = smul.addr %s454, 128
        %s456 = scalar_lea.vmem [#allocation5], %s455
        // Predicated region
        $region69: #{tpu_custom_call.1} parent=63 // pred_check
          %p457 = pneg %p80
        $region70: #{tpu_custom_call.1} parent=63 // pred_check_branch
          %459 = sbr.rel (%p457) target = $region72
        $region71: #{tpu_custom_call.1} parent=63 // pred_region
          %460 = dma.done %s453, 2048
        $region72: #{tpu_custom_call.1} parent=63 // pred_fallthru
          _
        %s461 = sand.u32 %s33, 1
        %s462 = scalar_lea.sflag [#allocation6], %s461
        %s463 = sand.u32 %s93, 1
        %s464 = smul.addr %s463, 128
        %s465 = scalar_lea.vmem [#allocation7], %s464
        // Predicated region
        $region73: #{tpu_custom_call.1} parent=63 // pred_check
          %p466 = pneg %p106
        $region74: #{tpu_custom_call.1} parent=63 // pred_check_branch
          %468 = sbr.rel (%p466) target = $region76
        $region75: #{tpu_custom_call.1} parent=63 // pred_region
          %469 = dma.done %s462, 2048
        $region76: #{tpu_custom_call.1} parent=63 // pred_fallthru
          _
        // Predicated region
        $region77: #{tpu_custom_call.1} parent=63 // pred_check
          %p470 = pneg %p127
        $region78: #{tpu_custom_call.1} parent=63 // pred_check_branch
          %472 = sbr.rel (%p470) target = $region80
        $region79: #{tpu_custom_call.1} parent=63 // pred_region
          %473 = dma.done [#allocation9], 6144
        $region80: #{tpu_custom_call.1} parent=63 // pred_fallthru
          _
        // Predicated region
        $region81: #{tpu_custom_call.1} parent=63 // pred_check
          %p474 = pneg %p169
        $region82: #{tpu_custom_call.1} parent=63 // pred_check_branch
          %476 = sbr.rel (%p474) target = $region84
        $region83: #{tpu_custom_call.1} parent=63 // pred_region
          %477 = dma.done [#allocation9], 6144
        $region84: #{tpu_custom_call.1} parent=63 // pred_fallthru
          _
        // Predicated region
        $region85: #{tpu_custom_call.1} parent=63 // pred_check
          %p478 = pneg %p211
        $region86: #{tpu_custom_call.1} parent=63 // pred_check_branch
          %480 = sbr.rel (%p478) target = $region88
        $region87: #{tpu_custom_call.1} parent=63 // pred_region
          %481 = dma.done [#allocation12], 6144
        $region88: #{tpu_custom_call.1} parent=63 // pred_fallthru
          _
        %s482 = sand.u32 %s41, 1
        %s483 = scalar_lea.sflag [#allocation3], %s482
        %s484 = sand.u32 %s41, 1
        %s485 = smul.addr %s484, 128
        %s486 = scalar_lea.vmem [#allocation2], %s485
        %p487 = pneg %p54
        %p488 = pneg %p51
        %s489 = sand.u32 %s33, 1
        %s490 = scalar_lea.sflag [#allocation6], %s489
        %s491 = sand.u32 %s67, 1
        %s492 = smul.addr %s491, 128
        %s493 = scalar_lea.vmem [#allocation5], %s492
        %p494 = pneg %p80
        %p495 = pneg %p77
        %s496 = sand.u32 %s33, 1
        %s497 = scalar_lea.sflag [#allocation6], %s496
        %s498 = sand.u32 %s93, 1
        %s499 = smul.addr %s498, 128
        %s500 = scalar_lea.vmem [#allocation7], %s499
        %p501 = pneg %p106
        %p502 = pneg %p103
        %p503 = pneg %p127
        %p504 = pneg %p124
        %p505 = pneg %p148
        %p506 = pneg %p145
        %p507 = pneg %p169
        %p508 = pneg %p166
        %p509 = pneg %p190
        %p510 = pneg %p187
        %p511 = pneg %p211
        %p512 = pneg %p208
        %p513 = pneg %p232
        %p514 = pneg %p229
        %p515 = pneg %p253
        %p516 = pneg %p250
        %p517 = pneg %p274
        %p518 = pneg %p271
        %p519 = pneg %p300
        %p520 = pneg %p297
        %s521 = sand.u32 %s287, 1
        %s522 = scalar_lea.sflag [#allocation4], %s521
        %s523 = sand.u32 %s287, 1
        %s524 = smul.addr %s523, 128
        %s525 = scalar_lea.vmem [#allocation13], %s524
        %s526 = smul.u32 16, %s33
        %s527 = smul.u32 16, %s33
        %s528 = smul.u32 16, %s33
        %s529 = smul.u32 16, %s33
        %v530 = vld [vmem:[%s447] sm:$0xff]
        %v531 = vld [vmem:[%s447 + $0x8] sm:$0xff]
        %v532 = vld [vmem:[%s447 + $0x10] sm:$0xff]
        %v533 = vld [vmem:[%s447 + $0x18] sm:$0xff]
        %v534 = vld [vmem:[%s447 + $0x20] sm:$0xff]
        %v535 = vld [vmem:[%s447 + $0x28] sm:$0xff]
        %v536 = vld [vmem:[%s447 + $0x30] sm:$0xff]
        %v537 = vld [vmem:[%s447 + $0x38] sm:$0xff]
        %v538 = vld [vmem:[%s447 + $0x40] sm:$0xff]
        %v539 = vld [vmem:[%s447 + $0x48] sm:$0xff]
        %v540 = vld [vmem:[%s447 + $0x50] sm:$0xff]
        %v541 = vld [vmem:[%s447 + $0x58] sm:$0xff]
        %v542 = vld [vmem:[%s447 + $0x60] sm:$0xff]
        %v543 = vld [vmem:[%s447 + $0x68] sm:$0xff]
        %v544 = vld [vmem:[%s447 + $0x70] sm:$0xff]
        %v545 = vld [vmem:[%s447 + $0x78] sm:$0xff]
        %v546 = vld [vmem:[#allocation8] sm:$0xff]
        %v547 = vld [vmem:[#allocation8 + $0x8] sm:$0xff]
        %v548 = vld [vmem:[#allocation8 + $0x10] sm:$0xff]
        %v549 = vld [vmem:[#allocation8 + $0x18] sm:$0xff]
        %v550 = vld [vmem:[#allocation8 + $0x20] sm:$0xff]
        %v551 = vld [vmem:[#allocation8 + $0x28] sm:$0xff]
        %v552 = vld [vmem:[#allocation8 + $0x30] sm:$0xff]
        %v553 = vld [vmem:[#allocation8 + $0x38] sm:$0xff]
        %v554 = vld [vmem:[#allocation8 + $0x40] sm:$0xff]
        %v555 = vld [vmem:[#allocation8 + $0x48] sm:$0xff]
        %v556 = vld [vmem:[#allocation8 + $0x50] sm:$0xff]
        %v557 = vld [vmem:[#allocation8 + $0x58] sm:$0xff]
        %v558 = vld [vmem:[#allocation8 + $0x60] sm:$0xff]
        %v559 = vld [vmem:[#allocation8 + $0x68] sm:$0xff]
        %v560 = vld [vmem:[#allocation8 + $0x70] sm:$0xff]
        %v561 = vld [vmem:[#allocation8 + $0x78] sm:$0xff]
        %v562 = vld [vmem:[%s456] sm:$0xff]
        %v563 = vld [vmem:[%s456 + $0x8] sm:$0xff]
        %v564 = vld [vmem:[%s456 + $0x10] sm:$0xff]
        %v565 = vld [vmem:[%s456 + $0x18] sm:$0xff]
        %v566 = vld [vmem:[%s456 + $0x20] sm:$0xff]
        %v567 = vld [vmem:[%s456 + $0x28] sm:$0xff]
        %v568 = vld [vmem:[%s456 + $0x30] sm:$0xff]
        %v569 = vld [vmem:[%s456 + $0x38] sm:$0xff]
        %v570 = vld [vmem:[%s456 + $0x40] sm:$0xff]
        %v571 = vld [vmem:[%s456 + $0x48] sm:$0xff]
        %v572 = vld [vmem:[%s456 + $0x50] sm:$0xff]
        %v573 = vld [vmem:[%s456 + $0x58] sm:$0xff]
        %v574 = vld [vmem:[%s456 + $0x60] sm:$0xff]
        %v575 = vld [vmem:[%s456 + $0x68] sm:$0xff]
        %v576 = vld [vmem:[%s456 + $0x70] sm:$0xff]
        %v577 = vld [vmem:[%s456 + $0x78] sm:$0xff]
        %s578 = scalar_lea.vmem [#allocation8], 128
        %v579 = vld [vmem:[%s578] sm:$0xff]
        %v580 = vld [vmem:[%s578 + $0x8] sm:$0xff]
        %v581 = vld [vmem:[%s578 + $0x10] sm:$0xff]
        %v582 = vld [vmem:[%s578 + $0x18] sm:$0xff]
        %v583 = vld [vmem:[%s578 + $0x20] sm:$0xff]
        %v584 = vld [vmem:[%s578 + $0x28] sm:$0xff]
        %v585 = vld [vmem:[%s578 + $0x30] sm:$0xff]
        %v586 = vld [vmem:[%s578 + $0x38] sm:$0xff]
        %v587 = vld [vmem:[%s578 + $0x40] sm:$0xff]
        %v588 = vld [vmem:[%s578 + $0x48] sm:$0xff]
        %v589 = vld [vmem:[%s578 + $0x50] sm:$0xff]
        %v590 = vld [vmem:[%s578 + $0x58] sm:$0xff]
        %v591 = vld [vmem:[%s578 + $0x60] sm:$0xff]
        %v592 = vld [vmem:[%s578 + $0x68] sm:$0xff]
        %v593 = vld [vmem:[%s578 + $0x70] sm:$0xff]
        %v594 = vld [vmem:[%s578 + $0x78] sm:$0xff]
        %595 = vmatprep.subr.mxu0 0.0
        %596 = vmatpush1.msra.mxu0 %v594
        %597 = vmatprep.subr.mxu0 0.0
        %598 = vmatpush1.msra.mxu0 %v593
        %599 = vmatprep.subr.mxu0 0.0
        %600 = vmatpush1.msra.mxu0 %v592
        %601 = vmatprep.subr.mxu0 0.0
        %602 = vmatpush1.msra.mxu0 %v591
        %603 = vmatprep.subr.mxu0 0.0
        %604 = vmatpush1.msra.mxu0 %v590
        %605 = vmatprep.subr.mxu0 0.0
        %606 = vmatpush1.msra.mxu0 %v589
        %607 = vmatprep.subr.mxu0 0.0
        %608 = vmatpush1.msra.mxu0 %v588
        %609 = vmatprep.subr.mxu0 0.0
        %610 = vmatpush1.msra.mxu0 %v587
        %611 = vmatprep.subr.mxu0 0.0
        %612 = vmatpush1.msra.mxu0 %v586
        %613 = vmatprep.subr.mxu0 0.0
        %614 = vmatpush1.msra.mxu0 %v585
        %615 = vmatprep.subr.mxu0 0.0
        %616 = vmatpush1.msra.mxu0 %v584
        %617 = vmatprep.subr.mxu0 0.0
        %618 = vmatpush1.msra.mxu0 %v583
        %619 = vmatprep.subr.mxu0 0.0
        %620 = vmatpush1.msra.mxu0 %v582
        %621 = vmatprep.subr.mxu0 0.0
        %622 = vmatpush1.msra.mxu0 %v581
        %623 = vmatprep.subr.mxu0 0.0
        %624 = vmatpush1.msra.mxu0 %v580
        %625 = vmatprep.subr.mxu0 0.0
        %626 = vmatpush1.msra.mxu0 %v579
        %627 = vmatprep.subr.mxu0 0.0
        %628 = vmatpush2.msra.mxu0 0.0
        %629 = vmatprep.subr.mxu0 0.0
        %630 = vmatpush2.msra.mxu0 0.0
        %631 = vmatprep.subr.mxu0 0.0
        %632 = vmatpush2.msra.mxu0 0.0
        %633 = vmatprep.subr.mxu0 0.0
        %634 = vmatpush2.msra.mxu0 0.0
        %635 = vmatprep.subr.mxu0 0.0
        %636 = vmatpush2.msra.mxu0 0.0
        %637 = vmatprep.subr.mxu0 0.0
        %638 = vmatpush2.msra.mxu0 0.0
        %639 = vmatprep.subr.mxu0 0.0
        %640 = vmatpush2.msra.mxu0 0.0
        %641 = vmatprep.subr.mxu0 0.0
        %642 = vmatpush2.msra.mxu0 0.0
        %643 = vmatprep.subr.mxu0 0.0
        %644 = vmatpush2.msra.mxu0 0.0
        %645 = vmatprep.subr.mxu0 0.0
        %646 = vmatpush2.msra.mxu0 0.0
        %647 = vmatprep.subr.mxu0 0.0
        %648 = vmatpush2.msra.mxu0 0.0
        %649 = vmatprep.subr.mxu0 0.0
        %650 = vmatpush2.msra.mxu0 0.0
        %651 = vmatprep.subr.mxu0 0.0
        %652 = vmatpush2.msra.mxu0 0.0
        %653 = vmatprep.subr.mxu0 0.0
        %654 = vmatpush2.msra.mxu0 0.0
        %655 = vmatprep.subr.mxu0 0.0
        %656 = vmatpush2.msra.mxu0 0.0
        %657 = vmatprep.subr.mxu0 0.0
        %658 = vmatpush2.msra.mxu0 0.0
        %659 = vmatprep.mubr.f32.mxu0 0.0
        %660 = vmatmul.mubr.f32.gmra.mxu0 %v562
        %v661 = vpop.f32.mrf.mxu0
        %v662 = vadd.f32 0.0, %v661
        %v663 = vpop.f32.mrf.mxu0
        %664 = vmatprep.mubr.f32.mxu0 0.0
        %665 = vmatmul.mubr.f32.gmra.mxu0 %v563
        %v666 = vpop.f32.mrf.mxu0
        %v667 = vadd.f32 0.0, %v666
        %v668 = vpop.f32.mrf.mxu0
        %669 = vmatprep.mubr.f32.mxu0 0.0
        %670 = vmatmul.mubr.f32.gmra.mxu0 %v564
        %v671 = vpop.f32.mrf.mxu0
        %v672 = vadd.f32 0.0, %v671
        %v673 = vpop.f32.mrf.mxu0
        %674 = vmatprep.mubr.f32.mxu0 0.0
        %675 = vmatmul.mubr.f32.gmra.mxu0 %v565
        %v676 = vpop.f32.mrf.mxu0
        %v677 = vadd.f32 0.0, %v676
        %v678 = vpop.f32.mrf.mxu0
        %679 = vmatprep.mubr.f32.mxu0 0.0
        %680 = vmatmul.mubr.f32.gmra.mxu0 %v566
        %v681 = vpop.f32.mrf.mxu0
        %v682 = vadd.f32 0.0, %v681
        %v683 = vpop.f32.mrf.mxu0
        %684 = vmatprep.mubr.f32.mxu0 0.0
        %685 = vmatmul.mubr.f32.gmra.mxu0 %v567
        %v686 = vpop.f32.mrf.mxu0
        %v687 = vadd.f32 0.0, %v686
        %v688 = vpop.f32.mrf.mxu0
        %689 = vmatprep.mubr.f32.mxu0 0.0
        %690 = vmatmul.mubr.f32.gmra.mxu0 %v568
        %v691 = vpop.f32.mrf.mxu0
        %v692 = vadd.f32 0.0, %v691
        %v693 = vpop.f32.mrf.mxu0
        %694 = vmatprep.mubr.f32.mxu0 0.0
        %695 = vmatmul.mubr.f32.gmra.mxu0 %v569
        %v696 = vpop.f32.mrf.mxu0
        %v697 = vadd.f32 0.0, %v696
        %v698 = vpop.f32.mrf.mxu0
        %699 = vmatprep.mubr.f32.mxu0 0.0
        %700 = vmatmul.mubr.f32.gmra.mxu0 %v570
        %v701 = vpop.f32.mrf.mxu0
        %v702 = vadd.f32 0.0, %v701
        %v703 = vpop.f32.mrf.mxu0
        %704 = vmatprep.mubr.f32.mxu0 0.0
        %705 = vmatmul.mubr.f32.gmra.mxu0 %v571
        %v706 = vpop.f32.mrf.mxu0
        %v707 = vadd.f32 0.0, %v706
        %v708 = vpop.f32.mrf.mxu0
        %709 = vmatprep.mubr.f32.mxu0 0.0
        %710 = vmatmul.mubr.f32.gmra.mxu0 %v572
        %v711 = vpop.f32.mrf.mxu0
        %v712 = vadd.f32 0.0, %v711
        %v713 = vpop.f32.mrf.mxu0
        %714 = vmatprep.mubr.f32.mxu0 0.0
        %715 = vmatmul.mubr.f32.gmra.mxu0 %v573
        %v716 = vpop.f32.mrf.mxu0
        %v717 = vadd.f32 0.0, %v716
        %v718 = vpop.f32.mrf.mxu0
        %719 = vmatprep.mubr.f32.mxu0 0.0
        %720 = vmatmul.mubr.f32.gmra.mxu0 %v574
        %v721 = vpop.f32.mrf.mxu0
        %v722 = vadd.f32 0.0, %v721
        %v723 = vpop.f32.mrf.mxu0
        %724 = vmatprep.mubr.f32.mxu0 0.0
        %725 = vmatmul.mubr.f32.gmra.mxu0 %v575
        %v726 = vpop.f32.mrf.mxu0
        %v727 = vadd.f32 0.0, %v726
        %v728 = vpop.f32.mrf.mxu0
        %729 = vmatprep.mubr.f32.mxu0 0.0
        %730 = vmatmul.mubr.f32.gmra.mxu0 %v576
        %v731 = vpop.f32.mrf.mxu0
        %v732 = vadd.f32 0.0, %v731
        %v733 = vpop.f32.mrf.mxu0
        %734 = vmatprep.mubr.f32.mxu0 0.0
        %735 = vmatmul.mubr.f32.gmra.mxu0 %v577
        %v736 = vpop.f32.mrf.mxu0
        %v737 = vadd.f32 0.0, %v736
        %v738 = vpop.f32.mrf.mxu0
        %739 = vdwg.mxu0
        %740 = vmatprep.subr.mxu0 0.0
        %741 = vmatpush1.msra.mxu0 %v561
        %742 = vmatprep.subr.mxu0 0.0
        %743 = vmatpush1.msra.mxu0 %v560
        %744 = vmatprep.subr.mxu0 0.0
        %745 = vmatpush1.msra.mxu0 %v559
        %746 = vmatprep.subr.mxu0 0.0
        %747 = vmatpush1.msra.mxu0 %v558
        %748 = vmatprep.subr.mxu0 0.0
        %749 = vmatpush1.msra.mxu0 %v557
        %750 = vmatprep.subr.mxu0 0.0
        %751 = vmatpush1.msra.mxu0 %v556
        %752 = vmatprep.subr.mxu0 0.0
        %753 = vmatpush1.msra.mxu0 %v555
        %754 = vmatprep.subr.mxu0 0.0
        %755 = vmatpush1.msra.mxu0 %v554
        %756 = vmatprep.subr.mxu0 0.0
        %757 = vmatpush1.msra.mxu0 %v553
        %758 = vmatprep.subr.mxu0 0.0
        %759 = vmatpush1.msra.mxu0 %v552
        %760 = vmatprep.subr.mxu0 0.0
        %761 = vmatpush1.msra.mxu0 %v551
        %762 = vmatprep.subr.mxu0 0.0
        %763 = vmatpush1.msra.mxu0 %v550
        %764 = vmatprep.subr.mxu0 0.0
        %765 = vmatpush1.msra.mxu0 %v549
        %766 = vmatprep.subr.mxu0 0.0
        %767 = vmatpush1.msra.mxu0 %v548
        %768 = vmatprep.subr.mxu0 0.0
        %769 = vmatpush1.msra.mxu0 %v547
        %770 = vmatprep.subr.mxu0 0.0
        %771 = vmatpush1.msra.mxu0 %v546
        %772 = vmatprep.subr.mxu0 0.0
        %773 = vmatpush2.msra.mxu0 0.0
        %774 = vmatprep.subr.mxu0 0.0
        %775 = vmatpush2.msra.mxu0 0.0
        %776 = vmatprep.subr.mxu0 0.0
        %777 = vmatpush2.msra.mxu0 0.0
        %778 = vmatprep.subr.mxu0 0.0
        %779 = vmatpush2.msra.mxu0 0.0
        %780 = vmatprep.subr.mxu0 0.0
        %781 = vmatpush2.msra.mxu0 0.0
        %782 = vmatprep.subr.mxu0 0.0
        %783 = vmatpush2.msra.mxu0 0.0
        %784 = vmatprep.subr.mxu0 0.0
        %785 = vmatpush2.msra.mxu0 0.0
        %786 = vmatprep.subr.mxu0 0.0
        %787 = vmatpush2.msra.mxu0 0.0
        %788 = vmatprep.subr.mxu0 0.0
        %789 = vmatpush2.msra.mxu0 0.0
        %790 = vmatprep.subr.mxu0 0.0
        %791 = vmatpush2.msra.mxu0 0.0
        %792 = vmatprep.subr.mxu0 0.0
        %793 = vmatpush2.msra.mxu0 0.0
        %794 = vmatprep.subr.mxu0 0.0
        %795 = vmatpush2.msra.mxu0 0.0
        %796 = vmatprep.subr.mxu0 0.0
        %797 = vmatpush2.msra.mxu0 0.0
        %798 = vmatprep.subr.mxu0 0.0
        %799 = vmatpush2.msra.mxu0 0.0
        %800 = vmatprep.subr.mxu0 0.0
        %801 = vmatpush2.msra.mxu0 0.0
        %802 = vmatprep.subr.mxu0 0.0
        %803 = vmatpush2.msra.mxu0 0.0
        %804 = vmatprep.mubr.f32.mxu0 0.0
        %805 = vmatmul.mubr.f32.gmra.mxu0 %v530
        %v806 = vpop.f32.mrf.mxu0
        %v807 = vadd.f32 %v662, %v806
        %v808 = vpop.f32.mrf.mxu0
        %809 = vmatprep.mubr.f32.mxu0 0.0
        %810 = vmatmul.mubr.f32.gmra.mxu0 %v531
        %v811 = vpop.f32.mrf.mxu0
        %v812 = vadd.f32 %v667, %v811
        %v813 = vpop.f32.mrf.mxu0
        %814 = vmatprep.mubr.f32.mxu0 0.0
        %815 = vmatmul.mubr.f32.gmra.mxu0 %v532
        %v816 = vpop.f32.mrf.mxu0
        %v817 = vadd.f32 %v672, %v816
        %v818 = vpop.f32.mrf.mxu0
        %819 = vmatprep.mubr.f32.mxu0 0.0
        %820 = vmatmul.mubr.f32.gmra.mxu0 %v533
        %v821 = vpop.f32.mrf.mxu0
        %v822 = vadd.f32 %v677, %v821
        %v823 = vpop.f32.mrf.mxu0
        %824 = vmatprep.mubr.f32.mxu0 0.0
        %825 = vmatmul.mubr.f32.gmra.mxu0 %v534
        %v826 = vpop.f32.mrf.mxu0
        %v827 = vadd.f32 %v682, %v826
        %v828 = vpop.f32.mrf.mxu0
        %829 = vmatprep.mubr.f32.mxu0 0.0
        %830 = vmatmul.mubr.f32.gmra.mxu0 %v535
        %v831 = vpop.f32.mrf.mxu0
        %v832 = vadd.f32 %v687, %v831
        %v833 = vpop.f32.mrf.mxu0
        %834 = vmatprep.mubr.f32.mxu0 0.0
        %835 = vmatmul.mubr.f32.gmra.mxu0 %v536
        %v836 = vpop.f32.mrf.mxu0
        %v837 = vadd.f32 %v692, %v836
        %v838 = vpop.f32.mrf.mxu0
        %839 = vmatprep.mubr.f32.mxu0 0.0
        %840 = vmatmul.mubr.f32.gmra.mxu0 %v537
        %v841 = vpop.f32.mrf.mxu0
        %v842 = vadd.f32 %v697, %v841
        %v843 = vpop.f32.mrf.mxu0
        %844 = vmatprep.mubr.f32.mxu0 0.0
        %845 = vmatmul.mubr.f32.gmra.mxu0 %v538
        %v846 = vpop.f32.mrf.mxu0
        %v847 = vadd.f32 %v702, %v846
        %v848 = vpop.f32.mrf.mxu0
        %849 = vmatprep.mubr.f32.mxu0 0.0
        %850 = vmatmul.mubr.f32.gmra.mxu0 %v539
        %v851 = vpop.f32.mrf.mxu0
        %v852 = vadd.f32 %v707, %v851
        %v853 = vpop.f32.mrf.mxu0
        %854 = vmatprep.mubr.f32.mxu0 0.0
        %855 = vmatmul.mubr.f32.gmra.mxu0 %v540
        %v856 = vpop.f32.mrf.mxu0
        %v857 = vadd.f32 %v712, %v856
        %v858 = vpop.f32.mrf.mxu0
        %859 = vmatprep.mubr.f32.mxu0 0.0
        %860 = vmatmul.mubr.f32.gmra.mxu0 %v541
        %v861 = vpop.f32.mrf.mxu0
        %v862 = vadd.f32 %v717, %v861
        %v863 = vpop.f32.mrf.mxu0
        %864 = vmatprep.mubr.f32.mxu0 0.0
        %865 = vmatmul.mubr.f32.gmra.mxu0 %v542
        %v866 = vpop.f32.mrf.mxu0
        %v867 = vadd.f32 %v722, %v866
        %v868 = vpop.f32.mrf.mxu0
        %869 = vmatprep.mubr.f32.mxu0 0.0
        %870 = vmatmul.mubr.f32.gmra.mxu0 %v543
        %v871 = vpop.f32.mrf.mxu0
        %v872 = vadd.f32 %v727, %v871
        %v873 = vpop.f32.mrf.mxu0
        %874 = vmatprep.mubr.f32.mxu0 0.0
        %875 = vmatmul.mubr.f32.gmra.mxu0 %v544
        %v876 = vpop.f32.mrf.mxu0
        %v877 = vadd.f32 %v732, %v876
        %v878 = vpop.f32.mrf.mxu0
        %879 = vmatprep.mubr.f32.mxu0 0.0
        %880 = vmatmul.mubr.f32.gmra.mxu0 %v545
        %v881 = vpop.f32.mrf.mxu0
        %v882 = vadd.f32 %v737, %v881
        %v883 = vpop.f32.mrf.mxu0
        %884 = vdwg.mxu0
        %v885 = vld [vmem:[%s465] sm:$0xff]
        %v886 = vld [vmem:[%s465 + $0x8] sm:$0xff]
        %v887 = vld [vmem:[%s465 + $0x10] sm:$0xff]
        %v888 = vld [vmem:[%s465 + $0x18] sm:$0xff]
        %v889 = vld [vmem:[%s465 + $0x20] sm:$0xff]
        %v890 = vld [vmem:[%s465 + $0x28] sm:$0xff]
        %v891 = vld [vmem:[%s465 + $0x30] sm:$0xff]
        %v892 = vld [vmem:[%s465 + $0x38] sm:$0xff]
        %v893 = vld [vmem:[%s465 + $0x40] sm:$0xff]
        %v894 = vld [vmem:[%s465 + $0x48] sm:$0xff]
        %v895 = vld [vmem:[%s465 + $0x50] sm:$0xff]
        %v896 = vld [vmem:[%s465 + $0x58] sm:$0xff]
        %v897 = vld [vmem:[%s465 + $0x60] sm:$0xff]
        %v898 = vld [vmem:[%s465 + $0x68] sm:$0xff]
        %v899 = vld [vmem:[%s465 + $0x70] sm:$0xff]
        %v900 = vld [vmem:[%s465 + $0x78] sm:$0xff]
        %s901 = scalar_lea.vmem [#allocation8], 256
        %v902 = vld [vmem:[%s901] sm:$0xff]
        %v903 = vld [vmem:[%s901 + $0x8] sm:$0xff]
        %v904 = vld [vmem:[%s901 + $0x10] sm:$0xff]
        %v905 = vld [vmem:[%s901 + $0x18] sm:$0xff]
        %v906 = vld [vmem:[%s901 + $0x20] sm:$0xff]
        %v907 = vld [vmem:[%s901 + $0x28] sm:$0xff]
        %v908 = vld [vmem:[%s901 + $0x30] sm:$0xff]
        %v909 = vld [vmem:[%s901 + $0x38] sm:$0xff]
        %v910 = vld [vmem:[%s901 + $0x40] sm:$0xff]
        %v911 = vld [vmem:[%s901 + $0x48] sm:$0xff]
        %v912 = vld [vmem:[%s901 + $0x50] sm:$0xff]
        %v913 = vld [vmem:[%s901 + $0x58] sm:$0xff]
        %v914 = vld [vmem:[%s901 + $0x60] sm:$0xff]
        %v915 = vld [vmem:[%s901 + $0x68] sm:$0xff]
        %v916 = vld [vmem:[%s901 + $0x70] sm:$0xff]
        %v917 = vld [vmem:[%s901 + $0x78] sm:$0xff]
        %918 = vmatprep.subr.mxu0 0.0
        %919 = vmatpush1.msra.mxu0 %v917
        %920 = vmatprep.subr.mxu0 0.0
        %921 = vmatpush1.msra.mxu0 %v916
        %922 = vmatprep.subr.mxu0 0.0
        %923 = vmatpush1.msra.mxu0 %v915
        %924 = vmatprep.subr.mxu0 0.0
        %925 = vmatpush1.msra.mxu0 %v914
        %926 = vmatprep.subr.mxu0 0.0
        %927 = vmatpush1.msra.mxu0 %v913
        %928 = vmatprep.subr.mxu0 0.0
        %929 = vmatpush1.msra.mxu0 %v912
        %930 = vmatprep.subr.mxu0 0.0
        %931 = vmatpush1.msra.mxu0 %v911
        %932 = vmatprep.subr.mxu0 0.0
        %933 = vmatpush1.msra.mxu0 %v910
        %934 = vmatprep.subr.mxu0 0.0
        %935 = vmatpush1.msra.mxu0 %v909
        %936 = vmatprep.subr.mxu0 0.0
        %937 = vmatpush1.msra.mxu0 %v908
        %938 = vmatprep.subr.mxu0 0.0
        %939 = vmatpush1.msra.mxu0 %v907
        %940 = vmatprep.subr.mxu0 0.0
        %941 = vmatpush1.msra.mxu0 %v906
        %942 = vmatprep.subr.mxu0 0.0
        %943 = vmatpush1.msra.mxu0 %v905
        %944 = vmatprep.subr.mxu0 0.0
        %945 = vmatpush1.msra.mxu0 %v904
        %946 = vmatprep.subr.mxu0 0.0
        %947 = vmatpush1.msra.mxu0 %v903
        %948 = vmatprep.subr.mxu0 0.0
        %949 = vmatpush1.msra.mxu0 %v902
        %950 = vmatprep.subr.mxu0 0.0
        %951 = vmatpush2.msra.mxu0 0.0
        %952 = vmatprep.subr.mxu0 0.0
        %953 = vmatpush2.msra.mxu0 0.0
        %954 = vmatprep.subr.mxu0 0.0
        %955 = vmatpush2.msra.mxu0 0.0
        %956 = vmatprep.subr.mxu0 0.0
        %957 = vmatpush2.msra.mxu0 0.0
        %958 = vmatprep.subr.mxu0 0.0
        %959 = vmatpush2.msra.mxu0 0.0
        %960 = vmatprep.subr.mxu0 0.0
        %961 = vmatpush2.msra.mxu0 0.0
        %962 = vmatprep.subr.mxu0 0.0
        %963 = vmatpush2.msra.mxu0 0.0
        %964 = vmatprep.subr.mxu0 0.0
        %965 = vmatpush2.msra.mxu0 0.0
        %966 = vmatprep.subr.mxu0 0.0
        %967 = vmatpush2.msra.mxu0 0.0
        %968 = vmatprep.subr.mxu0 0.0
        %969 = vmatpush2.msra.mxu0 0.0
        %970 = vmatprep.subr.mxu0 0.0
        %971 = vmatpush2.msra.mxu0 0.0
        %972 = vmatprep.subr.mxu0 0.0
        %973 = vmatpush2.msra.mxu0 0.0
        %974 = vmatprep.subr.mxu0 0.0
        %975 = vmatpush2.msra.mxu0 0.0
        %976 = vmatprep.subr.mxu0 0.0
        %977 = vmatpush2.msra.mxu0 0.0
        %978 = vmatprep.subr.mxu0 0.0
        %979 = vmatpush2.msra.mxu0 0.0
        %980 = vmatprep.subr.mxu0 0.0
        %981 = vmatpush2.msra.mxu0 0.0
        %982 = vmatprep.mubr.f32.mxu0 0.0
        %983 = vmatmul.mubr.f32.gmra.mxu0 %v885
        %v984 = vpop.f32.mrf.mxu0
        %v985 = vadd.f32 0.0, %v984
        %v986 = vpop.f32.mrf.mxu0
        %987 = vmatprep.mubr.f32.mxu0 0.0
        %988 = vmatmul.mubr.f32.gmra.mxu0 %v886
        %v989 = vpop.f32.mrf.mxu0
        %v990 = vadd.f32 0.0, %v989
        %v991 = vpop.f32.mrf.mxu0
        %992 = vmatprep.mubr.f32.mxu0 0.0
        %993 = vmatmul.mubr.f32.gmra.mxu0 %v887
        %v994 = vpop.f32.mrf.mxu0
        %v995 = vadd.f32 0.0, %v994
        %v996 = vpop.f32.mrf.mxu0
        %997 = vmatprep.mubr.f32.mxu0 0.0
        %998 = vmatmul.mubr.f32.gmra.mxu0 %v888
        %v999 = vpop.f32.mrf.mxu0
        %v1000 = vadd.f32 0.0, %v999
        %v1001 = vpop.f32.mrf.mxu0
        %1002 = vmatprep.mubr.f32.mxu0 0.0
        %1003 = vmatmul.mubr.f32.gmra.mxu0 %v889
        %v1004 = vpop.f32.mrf.mxu0
        %v1005 = vadd.f32 0.0, %v1004
        %v1006 = vpop.f32.mrf.mxu0
        %1007 = vmatprep.mubr.f32.mxu0 0.0
        %1008 = vmatmul.mubr.f32.gmra.mxu0 %v890
        %v1009 = vpop.f32.mrf.mxu0
        %v1010 = vadd.f32 0.0, %v1009
        %v1011 = vpop.f32.mrf.mxu0
        %1012 = vmatprep.mubr.f32.mxu0 0.0
        %1013 = vmatmul.mubr.f32.gmra.mxu0 %v891
        %v1014 = vpop.f32.mrf.mxu0
        %v1015 = vadd.f32 0.0, %v1014
        %v1016 = vpop.f32.mrf.mxu0
        %1017 = vmatprep.mubr.f32.mxu0 0.0
        %1018 = vmatmul.mubr.f32.gmra.mxu0 %v892
        %v1019 = vpop.f32.mrf.mxu0
        %v1020 = vadd.f32 0.0, %v1019
        %v1021 = vpop.f32.mrf.mxu0
        %1022 = vmatprep.mubr.f32.mxu0 0.0
        %1023 = vmatmul.mubr.f32.gmra.mxu0 %v893
        %v1024 = vpop.f32.mrf.mxu0
        %v1025 = vadd.f32 0.0, %v1024
        %v1026 = vpop.f32.mrf.mxu0
        %1027 = vmatprep.mubr.f32.mxu0 0.0
        %1028 = vmatmul.mubr.f32.gmra.mxu0 %v894
        %v1029 = vpop.f32.mrf.mxu0
        %v1030 = vadd.f32 0.0, %v1029
        %v1031 = vpop.f32.mrf.mxu0
        %1032 = vmatprep.mubr.f32.mxu0 0.0
        %1033 = vmatmul.mubr.f32.gmra.mxu0 %v895
        %v1034 = vpop.f32.mrf.mxu0
        %v1035 = vadd.f32 0.0, %v1034
        %v1036 = vpop.f32.mrf.mxu0
        %1037 = vmatprep.mubr.f32.mxu0 0.0
        %1038 = vmatmul.mubr.f32.gmra.mxu0 %v896
        %v1039 = vpop.f32.mrf.mxu0
        %v1040 = vadd.f32 0.0, %v1039
        %v1041 = vpop.f32.mrf.mxu0
        %1042 = vmatprep.mubr.f32.mxu0 0.0
        %1043 = vmatmul.mubr.f32.gmra.mxu0 %v897
        %v1044 = vpop.f32.mrf.mxu0
        %v1045 = vadd.f32 0.0, %v1044
        %v1046 = vpop.f32.mrf.mxu0
        %1047 = vmatprep.mubr.f32.mxu0 0.0
        %1048 = vmatmul.mubr.f32.gmra.mxu0 %v898
        %v1049 = vpop.f32.mrf.mxu0
        %v1050 = vadd.f32 0.0, %v1049
        %v1051 = vpop.f32.mrf.mxu0
        %1052 = vmatprep.mubr.f32.mxu0 0.0
        %1053 = vmatmul.mubr.f32.gmra.mxu0 %v899
        %v1054 = vpop.f32.mrf.mxu0
        %v1055 = vadd.f32 0.0, %v1054
        %v1056 = vpop.f32.mrf.mxu0
        %1057 = vmatprep.mubr.f32.mxu0 0.0
        %1058 = vmatmul.mubr.f32.gmra.mxu0 %v900
        %v1059 = vpop.f32.mrf.mxu0
        %v1060 = vadd.f32 0.0, %v1059
        %v1061 = vpop.f32.mrf.mxu0
        %1062 = vdwg.mxu0
        %v1063 = vadd.f32 %v807, %v985
        %v1064 = vadd.f32 %v812, %v990
        %v1065 = vadd.f32 %v817, %v995
        %v1066 = vadd.f32 %v822, %v1000
        %v1067 = vadd.f32 %v827, %v1005
        %v1068 = vadd.f32 %v832, %v1010
        %v1069 = vadd.f32 %v837, %v1015
        %v1070 = vadd.f32 %v842, %v1020
        %v1071 = vadd.f32 %v847, %v1025
        %v1072 = vadd.f32 %v852, %v1030
        %v1073 = vadd.f32 %v857, %v1035
        %v1074 = vadd.f32 %v862, %v1040
        %v1075 = vadd.f32 %v867, %v1045
        %v1076 = vadd.f32 %v872, %v1050
        %v1077 = vadd.f32 %v877, %v1055
        %v1078 = vadd.f32 %v882, %v1060
        %v1079 = vld [vmem:[%s4] sm:$0x1]
        %v1081 = vlaneseq
        %v1082 = vshrl.u32 %v1081, 7
        %v1083 = vsub.s32 0, %v1082
        %v1084 = vrot.slane %v1079, %v1083
        %v1086 = vadd.f32 %v1063, %v1084
        %v1087 = vadd.f32 %v1064, %v1084
        %v1088 = vadd.f32 %v1065, %v1084
        %v1089 = vadd.f32 %v1066, %v1084
        %v1090 = vadd.f32 %v1067, %v1084
        %v1091 = vadd.f32 %v1068, %v1084
        %v1092 = vadd.f32 %v1069, %v1084
        %v1093 = vadd.f32 %v1070, %v1084
        %v1094 = vadd.f32 %v1071, %v1084
        %v1095 = vadd.f32 %v1072, %v1084
        %v1096 = vadd.f32 %v1073, %v1084
        %v1097 = vadd.f32 %v1074, %v1084
        %v1098 = vadd.f32 %v1075, %v1084
        %v1099 = vadd.f32 %v1076, %v1084
        %v1100 = vadd.f32 %v1077, %v1084
        %v1101 = vadd.f32 %v1078, %v1084
        %vm1102 = vcmp.gt.f32.partialorder %v1086, 0.0
        %vm1103 = vcmp.gt.f32.partialorder %v1087, 0.0
        %vm1104 = vcmp.gt.f32.partialorder %v1088, 0.0
        %vm1105 = vcmp.gt.f32.partialorder %v1089, 0.0
        %vm1106 = vcmp.gt.f32.partialorder %v1090, 0.0
        %vm1107 = vcmp.gt.f32.partialorder %v1091, 0.0
        %vm1108 = vcmp.gt.f32.partialorder %v1092, 0.0
        %vm1109 = vcmp.gt.f32.partialorder %v1093, 0.0
        %vm1110 = vcmp.gt.f32.partialorder %v1094, 0.0
        %vm1111 = vcmp.gt.f32.partialorder %v1095, 0.0
        %vm1112 = vcmp.gt.f32.partialorder %v1096, 0.0
        %vm1113 = vcmp.gt.f32.partialorder %v1097, 0.0
        %vm1114 = vcmp.gt.f32.partialorder %v1098, 0.0
        %vm1115 = vcmp.gt.f32.partialorder %v1099, 0.0
        %vm1116 = vcmp.gt.f32.partialorder %v1100, 0.0
        %vm1117 = vcmp.gt.f32.partialorder %v1101, 0.0
        %v1118 = vmul.f32 %v1086, 0.01
        %v1119 = vmul.f32 %v1087, 0.01
        %v1120 = vmul.f32 %v1088, 0.01
        %v1121 = vmul.f32 %v1089, 0.01
        %v1122 = vmul.f32 %v1090, 0.01
        %v1123 = vmul.f32 %v1091, 0.01
        %v1124 = vmul.f32 %v1092, 0.01
        %v1125 = vmul.f32 %v1093, 0.01
        %v1126 = vmul.f32 %v1094, 0.01
        %v1127 = vmul.f32 %v1095, 0.01
        %v1128 = vmul.f32 %v1096, 0.01
        %v1129 = vmul.f32 %v1097, 0.01
        %v1130 = vmul.f32 %v1098, 0.01
        %v1131 = vmul.f32 %v1099, 0.01
        %v1132 = vmul.f32 %v1100, 0.01
        %v1133 = vmul.f32 %v1101, 0.01
        %v1134 = vsel %vm1102, %v1086, %v1118
        %v1135 = vsel %vm1103, %v1087, %v1119
        %v1136 = vsel %vm1104, %v1088, %v1120
        %v1137 = vsel %vm1105, %v1089, %v1121
        %v1138 = vsel %vm1106, %v1090, %v1122
        %v1139 = vsel %vm1107, %v1091, %v1123
        %v1140 = vsel %vm1108, %v1092, %v1124
        %v1141 = vsel %vm1109, %v1093, %v1125
        %v1142 = vsel %vm1110, %v1094, %v1126
        %v1143 = vsel %vm1111, %v1095, %v1127
        %v1144 = vsel %vm1112, %v1096, %v1128
        %v1145 = vsel %vm1113, %v1097, %v1129
        %v1146 = vsel %vm1114, %v1098, %v1130
        %v1147 = vsel %vm1115, %v1099, %v1131
        %v1148 = vsel %vm1116, %v1100, %v1132
        %v1149 = vsel %vm1117, %v1101, %v1133
        %v1150 = vld [vmem:[#allocation10] sm:$0xff]
        %v1151 = vld [vmem:[#allocation10 + $0x8] sm:$0xff]
        %v1152 = vld [vmem:[#allocation10 + $0x10] sm:$0xff]
        %v1153 = vld [vmem:[#allocation10 + $0x18] sm:$0xff]
        %v1154 = vld [vmem:[#allocation10 + $0x20] sm:$0xff]
        %v1155 = vld [vmem:[#allocation10 + $0x28] sm:$0xff]
        %v1156 = vld [vmem:[#allocation10 + $0x30] sm:$0xff]
        %v1157 = vld [vmem:[#allocation10 + $0x38] sm:$0xff]
        %v1158 = vld [vmem:[#allocation10 + $0x40] sm:$0xff]
        %v1159 = vld [vmem:[#allocation10 + $0x48] sm:$0xff]
        %v1160 = vld [vmem:[#allocation10 + $0x50] sm:$0xff]
        %v1161 = vld [vmem:[#allocation10 + $0x58] sm:$0xff]
        %v1162 = vld [vmem:[#allocation10 + $0x60] sm:$0xff]
        %v1163 = vld [vmem:[#allocation10 + $0x68] sm:$0xff]
        %v1164 = vld [vmem:[#allocation10 + $0x70] sm:$0xff]
        %v1165 = vld [vmem:[#allocation10 + $0x78] sm:$0xff]
        %v1166 = vld [vmem:[#allocation10 + $0x80] sm:$0xff]
        %v1167 = vld [vmem:[#allocation10 + $0x88] sm:$0xff]
        %v1168 = vld [vmem:[#allocation10 + $0x90] sm:$0xff]
        %v1169 = vld [vmem:[#allocation10 + $0x98] sm:$0xff]
        %v1170 = vld [vmem:[#allocation10 + $0xa0] sm:$0xff]
        %v1171 = vld [vmem:[#allocation10 + $0xa8] sm:$0xff]
        %v1172 = vld [vmem:[#allocation10 + $0xb0] sm:$0xff]
        %v1173 = vld [vmem:[#allocation10 + $0xb8] sm:$0xff]
        %v1174 = vld [vmem:[#allocation10 + $0xc0] sm:$0xff]
        %v1175 = vld [vmem:[#allocation10 + $0xc8] sm:$0xff]
        %v1176 = vld [vmem:[#allocation10 + $0xd0] sm:$0xff]
        %v1177 = vld [vmem:[#allocation10 + $0xd8] sm:$0xff]
        %v1178 = vld [vmem:[#allocation10 + $0xe0] sm:$0xff]
        %v1179 = vld [vmem:[#allocation10 + $0xe8] sm:$0xff]
        %v1180 = vld [vmem:[#allocation10 + $0xf0] sm:$0xff]
        %v1181 = vld [vmem:[#allocation10 + $0xf8] sm:$0xff]
        %v1182 = vld [vmem:[#allocation10 + $0x100] sm:$0xff]
        %v1183 = vld [vmem:[#allocation10 + $0x108] sm:$0xff]
        %v1184 = vld [vmem:[#allocation10 + $0x110] sm:$0xff]
        %v1185 = vld [vmem:[#allocation10 + $0x118] sm:$0xff]
        %v1186 = vld [vmem:[#allocation10 + $0x120] sm:$0xff]
        %v1187 = vld [vmem:[#allocation10 + $0x128] sm:$0xff]
        %v1188 = vld [vmem:[#allocation10 + $0x130] sm:$0xff]
        %v1189 = vld [vmem:[#allocation10 + $0x138] sm:$0xff]
        %v1190 = vld [vmem:[#allocation10 + $0x140] sm:$0xff]
        %v1191 = vld [vmem:[#allocation10 + $0x148] sm:$0xff]
        %v1192 = vld [vmem:[#allocation10 + $0x150] sm:$0xff]
        %v1193 = vld [vmem:[#allocation10 + $0x158] sm:$0xff]
        %v1194 = vld [vmem:[#allocation10 + $0x160] sm:$0xff]
        %v1195 = vld [vmem:[#allocation10 + $0x168] sm:$0xff]
        %v1196 = vld [vmem:[#allocation10 + $0x170] sm:$0xff]
        %v1197 = vld [vmem:[#allocation10 + $0x178] sm:$0xff]
        %v1198 = vld [vmem:[%s6] sm:$0x7]
        %v1200 = vlaneseq
        %v1201 = vshrl.u32 %v1200, 7
        %v1202 = vsub.s32 0, %v1201
        %v1203 = vrot.slane %v1198, %v1202
        %v1204 = vlaneseq
        %v1205 = vshrl.u32 %v1204, 7
        %v1206 = vsub.s32 1, %v1205
        %v1207 = vrot.slane %v1198, %v1206
        %v1208 = vlaneseq
        %v1209 = vshrl.u32 %v1208, 7
        %v1210 = vsub.s32 2, %v1209
        %v1211 = vrot.slane %v1198, %v1210
        %1215 = vmatprep.subr.mxu0 %v1196
        %1216 = vmatpush1.msra.mxu0 %v1195
        %1217 = vmatprep.subr.mxu0 %v1193
        %1218 = vmatpush1.msra.mxu0 %v1192
        %1219 = vmatprep.subr.mxu0 %v1190
        %1220 = vmatpush1.msra.mxu0 %v1189
        %1221 = vmatprep.subr.mxu0 %v1187
        %1222 = vmatpush1.msra.mxu0 %v1186
        %1223 = vmatprep.subr.mxu0 %v1184
        %1224 = vmatpush1.msra.mxu0 %v1183
        %1225 = vmatprep.subr.mxu0 %v1181
        %1226 = vmatpush1.msra.mxu0 %v1180
        %1227 = vmatprep.subr.mxu0 %v1178
        %1228 = vmatpush1.msra.mxu0 %v1177
        %1229 = vmatprep.subr.mxu0 %v1175
        %1230 = vmatpush1.msra.mxu0 %v1174
        %1231 = vmatprep.subr.mxu0 %v1172
        %1232 = vmatpush1.msra.mxu0 %v1171
        %1233 = vmatprep.subr.mxu0 %v1169
        %1234 = vmatpush1.msra.mxu0 %v1168
        %1235 = vmatprep.subr.mxu0 %v1166
        %1236 = vmatpush1.msra.mxu0 %v1165
        %1237 = vmatprep.subr.mxu0 %v1163
        %1238 = vmatpush1.msra.mxu0 %v1162
        %1239 = vmatprep.subr.mxu0 %v1160
        %1240 = vmatpush1.msra.mxu0 %v1159
        %1241 = vmatprep.subr.mxu0 %v1157
        %1242 = vmatpush1.msra.mxu0 %v1156
        %1243 = vmatprep.subr.mxu0 %v1154
        %1244 = vmatpush1.msra.mxu0 %v1153
        %1245 = vmatprep.subr.mxu0 %v1151
        %1246 = vmatpush1.msra.mxu0 %v1150
        %1247 = vmatprep.subr.mxu0 0.0
        %1248 = vmatpush2.msra.mxu0 0.0
        %1249 = vmatprep.subr.mxu0 0.0
        %1250 = vmatpush2.msra.mxu0 0.0
        %1251 = vmatprep.subr.mxu0 0.0
        %1252 = vmatpush2.msra.mxu0 0.0
        %1253 = vmatprep.subr.mxu0 0.0
        %1254 = vmatpush2.msra.mxu0 0.0
        %1255 = vmatprep.subr.mxu0 0.0
        %1256 = vmatpush2.msra.mxu0 0.0
        %1257 = vmatprep.subr.mxu0 0.0
        %1258 = vmatpush2.msra.mxu0 0.0
        %1259 = vmatprep.subr.mxu0 0.0
        %1260 = vmatpush2.msra.mxu0 0.0
        %1261 = vmatprep.subr.mxu0 0.0
        %1262 = vmatpush2.msra.mxu0 0.0
        %1263 = vmatprep.subr.mxu0 0.0
        %1264 = vmatpush2.msra.mxu0 0.0
        %1265 = vmatprep.subr.mxu0 0.0
        %1266 = vmatpush2.msra.mxu0 0.0
        %1267 = vmatprep.subr.mxu0 0.0
        %1268 = vmatpush2.msra.mxu0 0.0
        %1269 = vmatprep.subr.mxu0 0.0
        %1270 = vmatpush2.msra.mxu0 0.0
        %1271 = vmatprep.subr.mxu0 0.0
        %1272 = vmatpush2.msra.mxu0 0.0
        %1273 = vmatprep.subr.mxu0 0.0
        %1274 = vmatpush2.msra.mxu0 0.0
        %1275 = vmatprep.subr.mxu0 0.0
        %1276 = vmatpush2.msra.mxu0 0.0
        %1277 = vmatprep.subr.mxu0 0.0
        %1278 = vmatpush2.msra.mxu0 0.0
        %1279 = vmatprep.mubr.f32.mxu0 0.0
        %1280 = vmatmul.mubr.f32.gmra.mxu0 %v1134
        %v1281 = vpop.f32.mrf.mxu0
        %v1282 = vadd.f32 %v1203, %v1281
        %v1283 = vpop.f32.mrf.mxu0
        %v1284 = vadd.f32 %v1207, %v1283
        %1285 = vmatprep.mubr.f32.mxu0 0.0
        %1286 = vmatmul.mubr.f32.gmra.mxu0 %v1135
        %v1287 = vpop.f32.mrf.mxu0
        %v1288 = vadd.f32 %v1203, %v1287
        %v1289 = vpop.f32.mrf.mxu0
        %v1290 = vadd.f32 %v1207, %v1289
        %1291 = vmatprep.mubr.f32.mxu0 0.0
        %1292 = vmatmul.mubr.f32.gmra.mxu0 %v1136
        %v1293 = vpop.f32.mrf.mxu0
        %v1294 = vadd.f32 %v1203, %v1293
        %v1295 = vpop.f32.mrf.mxu0
        %v1296 = vadd.f32 %v1207, %v1295
        %1297 = vmatprep.mubr.f32.mxu0 0.0
        %1298 = vmatmul.mubr.f32.gmra.mxu0 %v1137
        %v1299 = vpop.f32.mrf.mxu0
        %v1300 = vadd.f32 %v1203, %v1299
        %v1301 = vpop.f32.mrf.mxu0
        %v1302 = vadd.f32 %v1207, %v1301
        %1303 = vmatprep.mubr.f32.mxu0 0.0
        %1304 = vmatmul.mubr.f32.gmra.mxu0 %v1138
        %v1305 = vpop.f32.mrf.mxu0
        %v1306 = vadd.f32 %v1203, %v1305
        %v1307 = vpop.f32.mrf.mxu0
        %v1308 = vadd.f32 %v1207, %v1307
        %1309 = vmatprep.mubr.f32.mxu0 0.0
        %1310 = vmatmul.mubr.f32.gmra.mxu0 %v1139
        %v1311 = vpop.f32.mrf.mxu0
        %v1312 = vadd.f32 %v1203, %v1311
        %v1313 = vpop.f32.mrf.mxu0
        %v1314 = vadd.f32 %v1207, %v1313
        %1315 = vmatprep.mubr.f32.mxu0 0.0
        %1316 = vmatmul.mubr.f32.gmra.mxu0 %v1140
        %v1317 = vpop.f32.mrf.mxu0
        %v1318 = vadd.f32 %v1203, %v1317
        %v1319 = vpop.f32.mrf.mxu0
        %v1320 = vadd.f32 %v1207, %v1319
        %1321 = vmatprep.mubr.f32.mxu0 0.0
        %1322 = vmatmul.mubr.f32.gmra.mxu0 %v1141
        %v1323 = vpop.f32.mrf.mxu0
        %v1324 = vadd.f32 %v1203, %v1323
        %v1325 = vpop.f32.mrf.mxu0
        %v1326 = vadd.f32 %v1207, %v1325
        %1327 = vmatprep.mubr.f32.mxu0 0.0
        %1328 = vmatmul.mubr.f32.gmra.mxu0 %v1142
        %v1329 = vpop.f32.mrf.mxu0
        %v1330 = vadd.f32 %v1203, %v1329
        %v1331 = vpop.f32.mrf.mxu0
        %v1332 = vadd.f32 %v1207, %v1331
        %1333 = vmatprep.mubr.f32.mxu0 0.0
        %1334 = vmatmul.mubr.f32.gmra.mxu0 %v1143
        %v1335 = vpop.f32.mrf.mxu0
        %v1336 = vadd.f32 %v1203, %v1335
        %v1337 = vpop.f32.mrf.mxu0
        %v1338 = vadd.f32 %v1207, %v1337
        %1339 = vmatprep.mubr.f32.mxu0 0.0
        %1340 = vmatmul.mubr.f32.gmra.mxu0 %v1144
        %v1341 = vpop.f32.mrf.mxu0
        %v1342 = vadd.f32 %v1203, %v1341
        %v1343 = vpop.f32.mrf.mxu0
        %v1344 = vadd.f32 %v1207, %v1343
        %1345 = vmatprep.mubr.f32.mxu0 0.0
        %1346 = vmatmul.mubr.f32.gmra.mxu0 %v1145
        %v1347 = vpop.f32.mrf.mxu0
        %v1348 = vadd.f32 %v1203, %v1347
        %v1349 = vpop.f32.mrf.mxu0
        %v1350 = vadd.f32 %v1207, %v1349
        %1351 = vmatprep.mubr.f32.mxu0 0.0
        %1352 = vmatmul.mubr.f32.gmra.mxu0 %v1146
        %v1353 = vpop.f32.mrf.mxu0
        %v1354 = vadd.f32 %v1203, %v1353
        %v1355 = vpop.f32.mrf.mxu0
        %v1356 = vadd.f32 %v1207, %v1355
        %1357 = vmatprep.mubr.f32.mxu0 0.0
        %1358 = vmatmul.mubr.f32.gmra.mxu0 %v1147
        %v1359 = vpop.f32.mrf.mxu0
        %v1360 = vadd.f32 %v1203, %v1359
        %v1361 = vpop.f32.mrf.mxu0
        %v1362 = vadd.f32 %v1207, %v1361
        %1363 = vmatprep.mubr.f32.mxu0 0.0
        %1364 = vmatmul.mubr.f32.gmra.mxu0 %v1148
        %v1365 = vpop.f32.mrf.mxu0
        %v1366 = vadd.f32 %v1203, %v1365
        %v1367 = vpop.f32.mrf.mxu0
        %v1368 = vadd.f32 %v1207, %v1367
        %1369 = vmatprep.mubr.f32.mxu0 0.0
        %1370 = vmatmul.mubr.f32.gmra.mxu0 %v1149
        %v1371 = vpop.f32.mrf.mxu0
        %v1372 = vadd.f32 %v1203, %v1371
        %v1373 = vpop.f32.mrf.mxu0
        %v1374 = vadd.f32 %v1207, %v1373
        %1375 = vdwg.mxu0
        %1376 = vmatprep.subr.mxu0 0.0
        %1377 = vmatpush1.msra.mxu0 %v1197
        %1378 = vmatprep.subr.mxu0 0.0
        %1379 = vmatpush1.msra.mxu0 %v1194
        %1380 = vmatprep.subr.mxu0 0.0
        %1381 = vmatpush1.msra.mxu0 %v1191
        %1382 = vmatprep.subr.mxu0 0.0
        %1383 = vmatpush1.msra.mxu0 %v1188
        %1384 = vmatprep.subr.mxu0 0.0
        %1385 = vmatpush1.msra.mxu0 %v1185
        %1386 = vmatprep.subr.mxu0 0.0
        %1387 = vmatpush1.msra.mxu0 %v1182
        %1388 = vmatprep.subr.mxu0 0.0
        %1389 = vmatpush1.msra.mxu0 %v1179
        %1390 = vmatprep.subr.mxu0 0.0
        %1391 = vmatpush1.msra.mxu0 %v1176
        %1392 = vmatprep.subr.mxu0 0.0
        %1393 = vmatpush1.msra.mxu0 %v1173
        %1394 = vmatprep.subr.mxu0 0.0
        %1395 = vmatpush1.msra.mxu0 %v1170
        %1396 = vmatprep.subr.mxu0 0.0
        %1397 = vmatpush1.msra.mxu0 %v1167
        %1398 = vmatprep.subr.mxu0 0.0
        %1399 = vmatpush1.msra.mxu0 %v1164
        %1400 = vmatprep.subr.mxu0 0.0
        %1401 = vmatpush1.msra.mxu0 %v1161
        %1402 = vmatprep.subr.mxu0 0.0
        %1403 = vmatpush1.msra.mxu0 %v1158
        %1404 = vmatprep.subr.mxu0 0.0
        %1405 = vmatpush1.msra.mxu0 %v1155
        %1406 = vmatprep.subr.mxu0 0.0
        %1407 = vmatpush1.msra.mxu0 %v1152
        %1408 = vmatprep.subr.mxu0 0.0
        %1409 = vmatpush2.msra.mxu0 0.0
        %1410 = vmatprep.subr.mxu0 0.0
        %1411 = vmatpush2.msra.mxu0 0.0
        %1412 = vmatprep.subr.mxu0 0.0
        %1413 = vmatpush2.msra.mxu0 0.0
        %1414 = vmatprep.subr.mxu0 0.0
        %1415 = vmatpush2.msra.mxu0 0.0
        %1416 = vmatprep.subr.mxu0 0.0
        %1417 = vmatpush2.msra.mxu0 0.0
        %1418 = vmatprep.subr.mxu0 0.0
        %1419 = vmatpush2.msra.mxu0 0.0
        %1420 = vmatprep.subr.mxu0 0.0
        %1421 = vmatpush2.msra.mxu0 0.0
        %1422 = vmatprep.subr.mxu0 0.0
        %1423 = vmatpush2.msra.mxu0 0.0
        %1424 = vmatprep.subr.mxu0 0.0
        %1425 = vmatpush2.msra.mxu0 0.0
        %1426 = vmatprep.subr.mxu0 0.0
        %1427 = vmatpush2.msra.mxu0 0.0
        %1428 = vmatprep.subr.mxu0 0.0
        %1429 = vmatpush2.msra.mxu0 0.0
        %1430 = vmatprep.subr.mxu0 0.0
        %1431 = vmatpush2.msra.mxu0 0.0
        %1432 = vmatprep.subr.mxu0 0.0
        %1433 = vmatpush2.msra.mxu0 0.0
        %1434 = vmatprep.subr.mxu0 0.0
        %1435 = vmatpush2.msra.mxu0 0.0
        %1436 = vmatprep.subr.mxu0 0.0
        %1437 = vmatpush2.msra.mxu0 0.0
        %1438 = vmatprep.subr.mxu0 0.0
        %1439 = vmatpush2.msra.mxu0 0.0
        %1440 = vmatprep.mubr.f32.mxu0 0.0
        %1441 = vmatmul.mubr.f32.gmra.mxu0 %v1134
        %v1442 = vpop.f32.mrf.mxu0
        %v1443 = vadd.f32 %v1211, %v1442
        %v1444 = vpop.f32.mrf.mxu0
        %1445 = vmatprep.mubr.f32.mxu0 0.0
        %1446 = vmatmul.mubr.f32.gmra.mxu0 %v1135
        %v1447 = vpop.f32.mrf.mxu0
        %v1448 = vadd.f32 %v1211, %v1447
        %v1449 = vpop.f32.mrf.mxu0
        %1450 = vmatprep.mubr.f32.mxu0 0.0
        %1451 = vmatmul.mubr.f32.gmra.mxu0 %v1136
        %v1452 = vpop.f32.mrf.mxu0
        %v1453 = vadd.f32 %v1211, %v1452
        %v1454 = vpop.f32.mrf.mxu0
        %1455 = vmatprep.mubr.f32.mxu0 0.0
        %1456 = vmatmul.mubr.f32.gmra.mxu0 %v1137
        %v1457 = vpop.f32.mrf.mxu0
        %v1458 = vadd.f32 %v1211, %v1457
        %v1459 = vpop.f32.mrf.mxu0
        %1460 = vmatprep.mubr.f32.mxu0 0.0
        %1461 = vmatmul.mubr.f32.gmra.mxu0 %v1138
        %v1462 = vpop.f32.mrf.mxu0
        %v1463 = vadd.f32 %v1211, %v1462
        %v1464 = vpop.f32.mrf.mxu0
        %1465 = vmatprep.mubr.f32.mxu0 0.0
        %1466 = vmatmul.mubr.f32.gmra.mxu0 %v1139
        %v1467 = vpop.f32.mrf.mxu0
        %v1468 = vadd.f32 %v1211, %v1467
        %v1469 = vpop.f32.mrf.mxu0
        %1470 = vmatprep.mubr.f32.mxu0 0.0
        %1471 = vmatmul.mubr.f32.gmra.mxu0 %v1140
        %v1472 = vpop.f32.mrf.mxu0
        %v1473 = vadd.f32 %v1211, %v1472
        %v1474 = vpop.f32.mrf.mxu0
        %1475 = vmatprep.mubr.f32.mxu0 0.0
        %1476 = vmatmul.mubr.f32.gmra.mxu0 %v1141
        %v1477 = vpop.f32.mrf.mxu0
        %v1478 = vadd.f32 %v1211, %v1477
        %v1479 = vpop.f32.mrf.mxu0
        %1480 = vmatprep.mubr.f32.mxu0 0.0
        %1481 = vmatmul.mubr.f32.gmra.mxu0 %v1142
        %v1482 = vpop.f32.mrf.mxu0
        %v1483 = vadd.f32 %v1211, %v1482
        %v1484 = vpop.f32.mrf.mxu0
        %1485 = vmatprep.mubr.f32.mxu0 0.0
        %1486 = vmatmul.mubr.f32.gmra.mxu0 %v1143
        %v1487 = vpop.f32.mrf.mxu0
        %v1488 = vadd.f32 %v1211, %v1487
        %v1489 = vpop.f32.mrf.mxu0
        %1490 = vmatprep.mubr.f32.mxu0 0.0
        %1491 = vmatmul.mubr.f32.gmra.mxu0 %v1144
        %v1492 = vpop.f32.mrf.mxu0
        %v1493 = vadd.f32 %v1211, %v1492
        %v1494 = vpop.f32.mrf.mxu0
        %1495 = vmatprep.mubr.f32.mxu0 0.0
        %1496 = vmatmul.mubr.f32.gmra.mxu0 %v1145
        %v1497 = vpop.f32.mrf.mxu0
        %v1498 = vadd.f32 %v1211, %v1497
        %v1499 = vpop.f32.mrf.mxu0
        %1500 = vmatprep.mubr.f32.mxu0 0.0
        %1501 = vmatmul.mubr.f32.gmra.mxu0 %v1146
        %v1502 = vpop.f32.mrf.mxu0
        %v1503 = vadd.f32 %v1211, %v1502
        %v1504 = vpop.f32.mrf.mxu0
        %1505 = vmatprep.mubr.f32.mxu0 0.0
        %1506 = vmatmul.mubr.f32.gmra.mxu0 %v1147
        %v1507 = vpop.f32.mrf.mxu0
        %v1508 = vadd.f32 %v1211, %v1507
        %v1509 = vpop.f32.mrf.mxu0
        %1510 = vmatprep.mubr.f32.mxu0 0.0
        %1511 = vmatmul.mubr.f32.gmra.mxu0 %v1148
        %v1512 = vpop.f32.mrf.mxu0
        %v1513 = vadd.f32 %v1211, %v1512
        %v1514 = vpop.f32.mrf.mxu0
        %1515 = vmatprep.mubr.f32.mxu0 0.0
        %1516 = vmatmul.mubr.f32.gmra.mxu0 %v1149
        %v1517 = vpop.f32.mrf.mxu0
        %v1518 = vadd.f32 %v1211, %v1517
        %v1519 = vpop.f32.mrf.mxu0
        %1520 = vdwg.mxu0
        %v1521 = vld [vmem:[#allocation11] sm:$0xff]
        %v1522 = vld [vmem:[#allocation11 + $0x8] sm:$0xff]
        %v1523 = vld [vmem:[#allocation11 + $0x10] sm:$0xff]
        %v1524 = vld [vmem:[#allocation11 + $0x18] sm:$0xff]
        %v1525 = vld [vmem:[#allocation11 + $0x20] sm:$0xff]
        %v1526 = vld [vmem:[#allocation11 + $0x28] sm:$0xff]
        %v1527 = vld [vmem:[#allocation11 + $0x30] sm:$0xff]
        %v1528 = vld [vmem:[#allocation11 + $0x38] sm:$0xff]
        %v1529 = vld [vmem:[#allocation11 + $0x40] sm:$0xff]
        %v1530 = vld [vmem:[#allocation11 + $0x48] sm:$0xff]
        %v1531 = vld [vmem:[#allocation11 + $0x50] sm:$0xff]
        %v1532 = vld [vmem:[#allocation11 + $0x58] sm:$0xff]
        %v1533 = vld [vmem:[#allocation11 + $0x60] sm:$0xff]
        %v1534 = vld [vmem:[#allocation11 + $0x68] sm:$0xff]
        %v1535 = vld [vmem:[#allocation11 + $0x70] sm:$0xff]
        %v1536 = vld [vmem:[#allocation11 + $0x78] sm:$0xff]
        %v1537 = vld [vmem:[#allocation11 + $0x80] sm:$0xff]
        %v1538 = vld [vmem:[#allocation11 + $0x88] sm:$0xff]
        %v1539 = vld [vmem:[#allocation11 + $0x90] sm:$0xff]
        %v1540 = vld [vmem:[#allocation11 + $0x98] sm:$0xff]
        %v1541 = vld [vmem:[#allocation11 + $0xa0] sm:$0xff]
        %v1542 = vld [vmem:[#allocation11 + $0xa8] sm:$0xff]
        %v1543 = vld [vmem:[#allocation11 + $0xb0] sm:$0xff]
        %v1544 = vld [vmem:[#allocation11 + $0xb8] sm:$0xff]
        %v1545 = vld [vmem:[#allocation11 + $0xc0] sm:$0xff]
        %v1546 = vld [vmem:[#allocation11 + $0xc8] sm:$0xff]
        %v1547 = vld [vmem:[#allocation11 + $0xd0] sm:$0xff]
        %v1548 = vld [vmem:[#allocation11 + $0xd8] sm:$0xff]
        %v1549 = vld [vmem:[#allocation11 + $0xe0] sm:$0xff]
        %v1550 = vld [vmem:[#allocation11 + $0xe8] sm:$0xff]
        %v1551 = vld [vmem:[#allocation11 + $0xf0] sm:$0xff]
        %v1552 = vld [vmem:[#allocation11 + $0xf8] sm:$0xff]
        %v1553 = vld [vmem:[#allocation11 + $0x100] sm:$0xff]
        %v1554 = vld [vmem:[#allocation11 + $0x108] sm:$0xff]
        %v1555 = vld [vmem:[#allocation11 + $0x110] sm:$0xff]
        %v1556 = vld [vmem:[#allocation11 + $0x118] sm:$0xff]
        %v1557 = vld [vmem:[#allocation11 + $0x120] sm:$0xff]
        %v1558 = vld [vmem:[#allocation11 + $0x128] sm:$0xff]
        %v1559 = vld [vmem:[#allocation11 + $0x130] sm:$0xff]
        %v1560 = vld [vmem:[#allocation11 + $0x138] sm:$0xff]
        %v1561 = vld [vmem:[#allocation11 + $0x140] sm:$0xff]
        %v1562 = vld [vmem:[#allocation11 + $0x148] sm:$0xff]
        %v1563 = vld [vmem:[#allocation11 + $0x150] sm:$0xff]
        %v1564 = vld [vmem:[#allocation11 + $0x158] sm:$0xff]
        %v1565 = vld [vmem:[#allocation11 + $0x160] sm:$0xff]
        %v1566 = vld [vmem:[#allocation11 + $0x168] sm:$0xff]
        %v1567 = vld [vmem:[#allocation11 + $0x170] sm:$0xff]
        %v1568 = vld [vmem:[#allocation11 + $0x178] sm:$0xff]
        %v1569 = vld [vmem:[%s8] sm:$0x7]
        %v1571 = vlaneseq
        %v1572 = vshrl.u32 %v1571, 7
        %v1573 = vsub.s32 0, %v1572
        %v1574 = vrot.slane %v1569, %v1573
        %v1575 = vlaneseq
        %v1576 = vshrl.u32 %v1575, 7
        %v1577 = vsub.s32 1, %v1576
        %v1578 = vrot.slane %v1569, %v1577
        %v1579 = vlaneseq
        %v1580 = vshrl.u32 %v1579, 7
        %v1581 = vsub.s32 2, %v1580
        %v1582 = vrot.slane %v1569, %v1581
        %1586 = vmatprep.subr.mxu0 %v1567
        %1587 = vmatpush1.msra.mxu0 %v1566
        %1588 = vmatprep.subr.mxu0 %v1564
        %1589 = vmatpush1.msra.mxu0 %v1563
        %1590 = vmatprep.subr.mxu0 %v1561
        %1591 = vmatpush1.msra.mxu0 %v1560
        %1592 = vmatprep.subr.mxu0 %v1558
        %1593 = vmatpush1.msra.mxu0 %v1557
        %1594 = vmatprep.subr.mxu0 %v1555
        %1595 = vmatpush1.msra.mxu0 %v1554
        %1596 = vmatprep.subr.mxu0 %v1552
        %1597 = vmatpush1.msra.mxu0 %v1551
        %1598 = vmatprep.subr.mxu0 %v1549
        %1599 = vmatpush1.msra.mxu0 %v1548
        %1600 = vmatprep.subr.mxu0 %v1546
        %1601 = vmatpush1.msra.mxu0 %v1545
        %1602 = vmatprep.subr.mxu0 %v1543
        %1603 = vmatpush1.msra.mxu0 %v1542
        %1604 = vmatprep.subr.mxu0 %v1540
        %1605 = vmatpush1.msra.mxu0 %v1539
        %1606 = vmatprep.subr.mxu0 %v1537
        %1607 = vmatpush1.msra.mxu0 %v1536
        %1608 = vmatprep.subr.mxu0 %v1534
        %1609 = vmatpush1.msra.mxu0 %v1533
        %1610 = vmatprep.subr.mxu0 %v1531
        %1611 = vmatpush1.msra.mxu0 %v1530
        %1612 = vmatprep.subr.mxu0 %v1528
        %1613 = vmatpush1.msra.mxu0 %v1527
        %1614 = vmatprep.subr.mxu0 %v1525
        %1615 = vmatpush1.msra.mxu0 %v1524
        %1616 = vmatprep.subr.mxu0 %v1522
        %1617 = vmatpush1.msra.mxu0 %v1521
        %1618 = vmatprep.subr.mxu0 0.0
        %1619 = vmatpush2.msra.mxu0 0.0
        %1620 = vmatprep.subr.mxu0 0.0
        %1621 = vmatpush2.msra.mxu0 0.0
        %1622 = vmatprep.subr.mxu0 0.0
        %1623 = vmatpush2.msra.mxu0 0.0
        %1624 = vmatprep.subr.mxu0 0.0
        %1625 = vmatpush2.msra.mxu0 0.0
        %1626 = vmatprep.subr.mxu0 0.0
        %1627 = vmatpush2.msra.mxu0 0.0
        %1628 = vmatprep.subr.mxu0 0.0
        %1629 = vmatpush2.msra.mxu0 0.0
        %1630 = vmatprep.subr.mxu0 0.0
        %1631 = vmatpush2.msra.mxu0 0.0
        %1632 = vmatprep.subr.mxu0 0.0
        %1633 = vmatpush2.msra.mxu0 0.0
        %1634 = vmatprep.subr.mxu0 0.0
        %1635 = vmatpush2.msra.mxu0 0.0
        %1636 = vmatprep.subr.mxu0 0.0
        %1637 = vmatpush2.msra.mxu0 0.0
        %1638 = vmatprep.subr.mxu0 0.0
        %1639 = vmatpush2.msra.mxu0 0.0
        %1640 = vmatprep.subr.mxu0 0.0
        %1641 = vmatpush2.msra.mxu0 0.0
        %1642 = vmatprep.subr.mxu0 0.0
        %1643 = vmatpush2.msra.mxu0 0.0
        %1644 = vmatprep.subr.mxu0 0.0
        %1645 = vmatpush2.msra.mxu0 0.0
        %1646 = vmatprep.subr.mxu0 0.0
        %1647 = vmatpush2.msra.mxu0 0.0
        %1648 = vmatprep.subr.mxu0 0.0
        %1649 = vmatpush2.msra.mxu0 0.0
        %1650 = vmatprep.mubr.f32.mxu0 0.0
        %1651 = vmatmul.mubr.f32.gmra.mxu0 %v530
        %v1652 = vpop.f32.mrf.mxu0
        %v1653 = vadd.f32 %v1574, %v1652
        %v1654 = vpop.f32.mrf.mxu0
        %v1655 = vadd.f32 %v1578, %v1654
        %1656 = vmatprep.mubr.f32.mxu0 0.0
        %1657 = vmatmul.mubr.f32.gmra.mxu0 %v531
        %v1658 = vpop.f32.mrf.mxu0
        %v1659 = vadd.f32 %v1574, %v1658
        %v1660 = vpop.f32.mrf.mxu0
        %v1661 = vadd.f32 %v1578, %v1660
        %1662 = vmatprep.mubr.f32.mxu0 0.0
        %1663 = vmatmul.mubr.f32.gmra.mxu0 %v532
        %v1664 = vpop.f32.mrf.mxu0
        %v1665 = vadd.f32 %v1574, %v1664
        %v1666 = vpop.f32.mrf.mxu0
        %v1667 = vadd.f32 %v1578, %v1666
        %1668 = vmatprep.mubr.f32.mxu0 0.0
        %1669 = vmatmul.mubr.f32.gmra.mxu0 %v533
        %v1670 = vpop.f32.mrf.mxu0
        %v1671 = vadd.f32 %v1574, %v1670
        %v1672 = vpop.f32.mrf.mxu0
        %v1673 = vadd.f32 %v1578, %v1672
        %1674 = vmatprep.mubr.f32.mxu0 0.0
        %1675 = vmatmul.mubr.f32.gmra.mxu0 %v534
        %v1676 = vpop.f32.mrf.mxu0
        %v1677 = vadd.f32 %v1574, %v1676
        %v1678 = vpop.f32.mrf.mxu0
        %v1679 = vadd.f32 %v1578, %v1678
        %1680 = vmatprep.mubr.f32.mxu0 0.0
        %1681 = vmatmul.mubr.f32.gmra.mxu0 %v535
        %v1682 = vpop.f32.mrf.mxu0
        %v1683 = vadd.f32 %v1574, %v1682
        %v1684 = vpop.f32.mrf.mxu0
        %v1685 = vadd.f32 %v1578, %v1684
        %1686 = vmatprep.mubr.f32.mxu0 0.0
        %1687 = vmatmul.mubr.f32.gmra.mxu0 %v536
        %v1688 = vpop.f32.mrf.mxu0
        %v1689 = vadd.f32 %v1574, %v1688
        %v1690 = vpop.f32.mrf.mxu0
        %v1691 = vadd.f32 %v1578, %v1690
        %1692 = vmatprep.mubr.f32.mxu0 0.0
        %1693 = vmatmul.mubr.f32.gmra.mxu0 %v537
        %v1694 = vpop.f32.mrf.mxu0
        %v1695 = vadd.f32 %v1574, %v1694
        %v1696 = vpop.f32.mrf.mxu0
        %v1697 = vadd.f32 %v1578, %v1696
        %1698 = vmatprep.mubr.f32.mxu0 0.0
        %1699 = vmatmul.mubr.f32.gmra.mxu0 %v538
        %v1700 = vpop.f32.mrf.mxu0
        %v1701 = vadd.f32 %v1574, %v1700
        %v1702 = vpop.f32.mrf.mxu0
        %v1703 = vadd.f32 %v1578, %v1702
        %1704 = vmatprep.mubr.f32.mxu0 0.0
        %1705 = vmatmul.mubr.f32.gmra.mxu0 %v539
        %v1706 = vpop.f32.mrf.mxu0
        %v1707 = vadd.f32 %v1574, %v1706
        %v1708 = vpop.f32.mrf.mxu0
        %v1709 = vadd.f32 %v1578, %v1708
        %1710 = vmatprep.mubr.f32.mxu0 0.0
        %1711 = vmatmul.mubr.f32.gmra.mxu0 %v540
        %v1712 = vpop.f32.mrf.mxu0
        %v1713 = vadd.f32 %v1574, %v1712
        %v1714 = vpop.f32.mrf.mxu0
        %v1715 = vadd.f32 %v1578, %v1714
        %1716 = vmatprep.mubr.f32.mxu0 0.0
        %1717 = vmatmul.mubr.f32.gmra.mxu0 %v541
        %v1718 = vpop.f32.mrf.mxu0
        %v1719 = vadd.f32 %v1574, %v1718
        %v1720 = vpop.f32.mrf.mxu0
        %v1721 = vadd.f32 %v1578, %v1720
        %1722 = vmatprep.mubr.f32.mxu0 0.0
        %1723 = vmatmul.mubr.f32.gmra.mxu0 %v542
        %v1724 = vpop.f32.mrf.mxu0
        %v1725 = vadd.f32 %v1574, %v1724
        %v1726 = vpop.f32.mrf.mxu0
        %v1727 = vadd.f32 %v1578, %v1726
        %1728 = vmatprep.mubr.f32.mxu0 0.0
        %1729 = vmatmul.mubr.f32.gmra.mxu0 %v543
        %v1730 = vpop.f32.mrf.mxu0
        %v1731 = vadd.f32 %v1574, %v1730
        %v1732 = vpop.f32.mrf.mxu0
        %v1733 = vadd.f32 %v1578, %v1732
        %1734 = vmatprep.mubr.f32.mxu0 0.0
        %1735 = vmatmul.mubr.f32.gmra.mxu0 %v544
        %v1736 = vpop.f32.mrf.mxu0
        %v1737 = vadd.f32 %v1574, %v1736
        %v1738 = vpop.f32.mrf.mxu0
        %v1739 = vadd.f32 %v1578, %v1738
        %1740 = vmatprep.mubr.f32.mxu0 0.0
        %1741 = vmatmul.mubr.f32.gmra.mxu0 %v545
        %v1742 = vpop.f32.mrf.mxu0
        %v1743 = vadd.f32 %v1574, %v1742
        %v1744 = vpop.f32.mrf.mxu0
        %v1745 = vadd.f32 %v1578, %v1744
        %1746 = vdwg.mxu0
        %1747 = vmatprep.subr.mxu0 0.0
        %1748 = vmatpush1.msra.mxu0 %v1568
        %1749 = vmatprep.subr.mxu0 0.0
        %1750 = vmatpush1.msra.mxu0 %v1565
        %1751 = vmatprep.subr.mxu0 0.0
        %1752 = vmatpush1.msra.mxu0 %v1562
        %1753 = vmatprep.subr.mxu0 0.0
        %1754 = vmatpush1.msra.mxu0 %v1559
        %1755 = vmatprep.subr.mxu0 0.0
        %1756 = vmatpush1.msra.mxu0 %v1556
        %1757 = vmatprep.subr.mxu0 0.0
        %1758 = vmatpush1.msra.mxu0 %v1553
        %1759 = vmatprep.subr.mxu0 0.0
        %1760 = vmatpush1.msra.mxu0 %v1550
        %1761 = vmatprep.subr.mxu0 0.0
        %1762 = vmatpush1.msra.mxu0 %v1547
        %1763 = vmatprep.subr.mxu0 0.0
        %1764 = vmatpush1.msra.mxu0 %v1544
        %1765 = vmatprep.subr.mxu0 0.0
        %1766 = vmatpush1.msra.mxu0 %v1541
        %1767 = vmatprep.subr.mxu0 0.0
        %1768 = vmatpush1.msra.mxu0 %v1538
        %1769 = vmatprep.subr.mxu0 0.0
        %1770 = vmatpush1.msra.mxu0 %v1535
        %1771 = vmatprep.subr.mxu0 0.0
        %1772 = vmatpush1.msra.mxu0 %v1532
        %1773 = vmatprep.subr.mxu0 0.0
        %1774 = vmatpush1.msra.mxu0 %v1529
        %1775 = vmatprep.subr.mxu0 0.0
        %1776 = vmatpush1.msra.mxu0 %v1526
        %1777 = vmatprep.subr.mxu0 0.0
        %1778 = vmatpush1.msra.mxu0 %v1523
        %1779 = vmatprep.subr.mxu0 0.0
        %1780 = vmatpush2.msra.mxu0 0.0
        %1781 = vmatprep.subr.mxu0 0.0
        %1782 = vmatpush2.msra.mxu0 0.0
        %1783 = vmatprep.subr.mxu0 0.0
        %1784 = vmatpush2.msra.mxu0 0.0
        %1785 = vmatprep.subr.mxu0 0.0
        %1786 = vmatpush2.msra.mxu0 0.0
        %1787 = vmatprep.subr.mxu0 0.0
        %1788 = vmatpush2.msra.mxu0 0.0
        %1789 = vmatprep.subr.mxu0 0.0
        %1790 = vmatpush2.msra.mxu0 0.0
        %1791 = vmatprep.subr.mxu0 0.0
        %1792 = vmatpush2.msra.mxu0 0.0
        %1793 = vmatprep.subr.mxu0 0.0
        %1794 = vmatpush2.msra.mxu0 0.0
        %1795 = vmatprep.subr.mxu0 0.0
        %1796 = vmatpush2.msra.mxu0 0.0
        %1797 = vmatprep.subr.mxu0 0.0
        %1798 = vmatpush2.msra.mxu0 0.0
        %1799 = vmatprep.subr.mxu0 0.0
        %1800 = vmatpush2.msra.mxu0 0.0
        %1801 = vmatprep.subr.mxu0 0.0
        %1802 = vmatpush2.msra.mxu0 0.0
        %1803 = vmatprep.subr.mxu0 0.0
        %1804 = vmatpush2.msra.mxu0 0.0
        %1805 = vmatprep.subr.mxu0 0.0
        %1806 = vmatpush2.msra.mxu0 0.0
        %1807 = vmatprep.subr.mxu0 0.0
        %1808 = vmatpush2.msra.mxu0 0.0
        %1809 = vmatprep.subr.mxu0 0.0
        %1810 = vmatpush2.msra.mxu0 0.0
        %1811 = vmatprep.mubr.f32.mxu0 0.0
        %1812 = vmatmul.mubr.f32.gmra.mxu0 %v530
        %v1813 = vpop.f32.mrf.mxu0
        %v1814 = vadd.f32 %v1582, %v1813
        %v1815 = vpop.f32.mrf.mxu0
        %1816 = vmatprep.mubr.f32.mxu0 0.0
        %1817 = vmatmul.mubr.f32.gmra.mxu0 %v531
        %v1818 = vpop.f32.mrf.mxu0
        %v1819 = vadd.f32 %v1582, %v1818
        %v1820 = vpop.f32.mrf.mxu0
        %1821 = vmatprep.mubr.f32.mxu0 0.0
        %1822 = vmatmul.mubr.f32.gmra.mxu0 %v532
        %v1823 = vpop.f32.mrf.mxu0
        %v1824 = vadd.f32 %v1582, %v1823
        %v1825 = vpop.f32.mrf.mxu0
        %1826 = vmatprep.mubr.f32.mxu0 0.0
        %1827 = vmatmul.mubr.f32.gmra.mxu0 %v533
        %v1828 = vpop.f32.mrf.mxu0
        %v1829 = vadd.f32 %v1582, %v1828
        %v1830 = vpop.f32.mrf.mxu0
        %1831 = vmatprep.mubr.f32.mxu0 0.0
        %1832 = vmatmul.mubr.f32.gmra.mxu0 %v534
        %v1833 = vpop.f32.mrf.mxu0
        %v1834 = vadd.f32 %v1582, %v1833
        %v1835 = vpop.f32.mrf.mxu0
        %1836 = vmatprep.mubr.f32.mxu0 0.0
        %1837 = vmatmul.mubr.f32.gmra.mxu0 %v535
        %v1838 = vpop.f32.mrf.mxu0
        %v1839 = vadd.f32 %v1582, %v1838
        %v1840 = vpop.f32.mrf.mxu0
        %1841 = vmatprep.mubr.f32.mxu0 0.0
        %1842 = vmatmul.mubr.f32.gmra.mxu0 %v536
        %v1843 = vpop.f32.mrf.mxu0
        %v1844 = vadd.f32 %v1582, %v1843
        %v1845 = vpop.f32.mrf.mxu0
        %1846 = vmatprep.mubr.f32.mxu0 0.0
        %1847 = vmatmul.mubr.f32.gmra.mxu0 %v537
        %v1848 = vpop.f32.mrf.mxu0
        %v1849 = vadd.f32 %v1582, %v1848
        %v1850 = vpop.f32.mrf.mxu0
        %1851 = vmatprep.mubr.f32.mxu0 0.0
        %1852 = vmatmul.mubr.f32.gmra.mxu0 %v538
        %v1853 = vpop.f32.mrf.mxu0
        %v1854 = vadd.f32 %v1582, %v1853
        %v1855 = vpop.f32.mrf.mxu0
        %1856 = vmatprep.mubr.f32.mxu0 0.0
        %1857 = vmatmul.mubr.f32.gmra.mxu0 %v539
        %v1858 = vpop.f32.mrf.mxu0
        %v1859 = vadd.f32 %v1582, %v1858
        %v1860 = vpop.f32.mrf.mxu0
        %1861 = vmatprep.mubr.f32.mxu0 0.0
        %1862 = vmatmul.mubr.f32.gmra.mxu0 %v540
        %v1863 = vpop.f32.mrf.mxu0
        %v1864 = vadd.f32 %v1582, %v1863
        %v1865 = vpop.f32.mrf.mxu0
        %1866 = vmatprep.mubr.f32.mxu0 0.0
        %1867 = vmatmul.mubr.f32.gmra.mxu0 %v541
        %v1868 = vpop.f32.mrf.mxu0
        %v1869 = vadd.f32 %v1582, %v1868
        %v1870 = vpop.f32.mrf.mxu0
        %1871 = vmatprep.mubr.f32.mxu0 0.0
        %1872 = vmatmul.mubr.f32.gmra.mxu0 %v542
        %v1873 = vpop.f32.mrf.mxu0
        %v1874 = vadd.f32 %v1582, %v1873
        %v1875 = vpop.f32.mrf.mxu0
        %1876 = vmatprep.mubr.f32.mxu0 0.0
        %1877 = vmatmul.mubr.f32.gmra.mxu0 %v543
        %v1878 = vpop.f32.mrf.mxu0
        %v1879 = vadd.f32 %v1582, %v1878
        %v1880 = vpop.f32.mrf.mxu0
        %1881 = vmatprep.mubr.f32.mxu0 0.0
        %1882 = vmatmul.mubr.f32.gmra.mxu0 %v544
        %v1883 = vpop.f32.mrf.mxu0
        %v1884 = vadd.f32 %v1582, %v1883
        %v1885 = vpop.f32.mrf.mxu0
        %1886 = vmatprep.mubr.f32.mxu0 0.0
        %1887 = vmatmul.mubr.f32.gmra.mxu0 %v545
        %v1888 = vpop.f32.mrf.mxu0
        %v1889 = vadd.f32 %v1582, %v1888
        %v1890 = vpop.f32.mrf.mxu0
        %1891 = vdwg.mxu0
        %v1892 = vadd.f32 %v1282, %v1653
        %v1893 = vadd.f32 %v1288, %v1659
        %v1894 = vadd.f32 %v1294, %v1665
        %v1895 = vadd.f32 %v1300, %v1671
        %v1896 = vadd.f32 %v1306, %v1677
        %v1897 = vadd.f32 %v1312, %v1683
        %v1898 = vadd.f32 %v1318, %v1689
        %v1899 = vadd.f32 %v1324, %v1695
        %v1900 = vadd.f32 %v1330, %v1701
        %v1901 = vadd.f32 %v1336, %v1707
        %v1902 = vadd.f32 %v1342, %v1713
        %v1903 = vadd.f32 %v1348, %v1719
        %v1904 = vadd.f32 %v1354, %v1725
        %v1905 = vadd.f32 %v1360, %v1731
        %v1906 = vadd.f32 %v1366, %v1737
        %v1907 = vadd.f32 %v1372, %v1743
        %v1908 = vxor.u32 %v1892, 2147483648
        %v1909 = vxor.u32 %v1893, 2147483648
        %v1910 = vxor.u32 %v1894, 2147483648
        %v1911 = vxor.u32 %v1895, 2147483648
        %v1912 = vxor.u32 %v1896, 2147483648
        %v1913 = vxor.u32 %v1897, 2147483648
        %v1914 = vxor.u32 %v1898, 2147483648
        %v1915 = vxor.u32 %v1899, 2147483648
        %v1916 = vxor.u32 %v1900, 2147483648
        %v1917 = vxor.u32 %v1901, 2147483648
        %v1918 = vxor.u32 %v1902, 2147483648
        %v1919 = vxor.u32 %v1903, 2147483648
        %v1920 = vxor.u32 %v1904, 2147483648
        %v1921 = vxor.u32 %v1905, 2147483648
        %v1922 = vxor.u32 %v1906, 2147483648
        %v1923 = vxor.u32 %v1907, 2147483648
        %v1924 = vmul.f32 %v1908, 1.442695
        %v1925 = vpow.pop %v1924
        %v1926 = vmul.f32 %v1909, 1.442695
        %v1927 = vpow.pop %v1926
        %v1928 = vmul.f32 %v1910, 1.442695
        %v1929 = vpow.pop %v1928
        %v1930 = vmul.f32 %v1911, 1.442695
        %v1931 = vpow.pop %v1930
        %v1932 = vmul.f32 %v1912, 1.442695
        %v1933 = vpow.pop %v1932
        %v1934 = vmul.f32 %v1913, 1.442695
        %v1935 = vpow.pop %v1934
        %v1936 = vmul.f32 %v1914, 1.442695
        %v1937 = vpow.pop %v1936
        %v1938 = vmul.f32 %v1915, 1.442695
        %v1939 = vpow.pop %v1938
        %v1940 = vmul.f32 %v1916, 1.442695
        %v1941 = vpow.pop %v1940
        %v1942 = vmul.f32 %v1917, 1.442695
        %v1943 = vpow.pop %v1942
        %v1944 = vmul.f32 %v1918, 1.442695
        %v1945 = vpow.pop %v1944
        %v1946 = vmul.f32 %v1919, 1.442695
        %v1947 = vpow.pop %v1946
        %v1948 = vmul.f32 %v1920, 1.442695
        %v1949 = vpow.pop %v1948
        %v1950 = vmul.f32 %v1921, 1.442695
        %v1951 = vpow.pop %v1950
        %v1952 = vmul.f32 %v1922, 1.442695
        %v1953 = vpow.pop %v1952
        %v1954 = vmul.f32 %v1923, 1.442695
        %v1955 = vpow.pop %v1954
        %v1956 = vadd.f32 %v1925, 1.0
        %v1957 = vadd.f32 %v1927, 1.0
        %v1958 = vadd.f32 %v1929, 1.0
        %v1959 = vadd.f32 %v1931, 1.0
        %v1960 = vadd.f32 %v1933, 1.0
        %v1961 = vadd.f32 %v1935, 1.0
        %v1962 = vadd.f32 %v1937, 1.0
        %v1963 = vadd.f32 %v1939, 1.0
        %v1964 = vadd.f32 %v1941, 1.0
        %v1965 = vadd.f32 %v1943, 1.0
        %v1966 = vadd.f32 %v1945, 1.0
        %v1967 = vadd.f32 %v1947, 1.0
        %v1968 = vadd.f32 %v1949, 1.0
        %v1969 = vadd.f32 %v1951, 1.0
        %v1970 = vadd.f32 %v1953, 1.0
        %v1971 = vadd.f32 %v1955, 1.0
        %v1972 = vrcp.pop %v1956
        %v1973 = vmul.f32 1.0, %v1972
        %v1974 = vrcp.pop %v1957
        %v1975 = vmul.f32 1.0, %v1974
        %v1976 = vrcp.pop %v1958
        %v1977 = vmul.f32 1.0, %v1976
        %v1978 = vrcp.pop %v1959
        %v1979 = vmul.f32 1.0, %v1978
        %v1980 = vrcp.pop %v1960
        %v1981 = vmul.f32 1.0, %v1980
        %v1982 = vrcp.pop %v1961
        %v1983 = vmul.f32 1.0, %v1982
        %v1984 = vrcp.pop %v1962
        %v1985 = vmul.f32 1.0, %v1984
        %v1986 = vrcp.pop %v1963
        %v1987 = vmul.f32 1.0, %v1986
        %v1988 = vrcp.pop %v1964
        %v1989 = vmul.f32 1.0, %v1988
        %v1990 = vrcp.pop %v1965
        %v1991 = vmul.f32 1.0, %v1990
        %v1992 = vrcp.pop %v1966
        %v1993 = vmul.f32 1.0, %v1992
        %v1994 = vrcp.pop %v1967
        %v1995 = vmul.f32 1.0, %v1994
        %v1996 = vrcp.pop %v1968
        %v1997 = vmul.f32 1.0, %v1996
        %v1998 = vrcp.pop %v1969
        %v1999 = vmul.f32 1.0, %v1998
        %v2000 = vrcp.pop %v1970
        %v2001 = vmul.f32 1.0, %v2000
        %v2002 = vrcp.pop %v1971
        %v2003 = vmul.f32 1.0, %v2002
        %v2004 = vadd.f32 %v1284, %v1655
        %v2005 = vadd.f32 %v1290, %v1661
        %v2006 = vadd.f32 %v1296, %v1667
        %v2007 = vadd.f32 %v1302, %v1673
        %v2008 = vadd.f32 %v1308, %v1679
        %v2009 = vadd.f32 %v1314, %v1685
        %v2010 = vadd.f32 %v1320, %v1691
        %v2011 = vadd.f32 %v1326, %v1697
        %v2012 = vadd.f32 %v1332, %v1703
        %v2013 = vadd.f32 %v1338, %v1709
        %v2014 = vadd.f32 %v1344, %v1715
        %v2015 = vadd.f32 %v1350, %v1721
        %v2016 = vadd.f32 %v1356, %v1727
        %v2017 = vadd.f32 %v1362, %v1733
        %v2018 = vadd.f32 %v1368, %v1739
        %v2019 = vadd.f32 %v1374, %v1745
        %v2020 = vxor.u32 %v2004, 2147483648
        %v2021 = vxor.u32 %v2005, 2147483648
        %v2022 = vxor.u32 %v2006, 2147483648
        %v2023 = vxor.u32 %v2007, 2147483648
        %v2024 = vxor.u32 %v2008, 2147483648
        %v2025 = vxor.u32 %v2009, 2147483648
        %v2026 = vxor.u32 %v2010, 2147483648
        %v2027 = vxor.u32 %v2011, 2147483648
        %v2028 = vxor.u32 %v2012, 2147483648
        %v2029 = vxor.u32 %v2013, 2147483648
        %v2030 = vxor.u32 %v2014, 2147483648
        %v2031 = vxor.u32 %v2015, 2147483648
        %v2032 = vxor.u32 %v2016, 2147483648
        %v2033 = vxor.u32 %v2017, 2147483648
        %v2034 = vxor.u32 %v2018, 2147483648
        %v2035 = vxor.u32 %v2019, 2147483648
        %v2036 = vmul.f32 %v2020, 1.442695
        %v2037 = vpow.pop %v2036
        %v2038 = vmul.f32 %v2021, 1.442695
        %v2039 = vpow.pop %v2038
        %v2040 = vmul.f32 %v2022, 1.442695
        %v2041 = vpow.pop %v2040
        %v2042 = vmul.f32 %v2023, 1.442695
        %v2043 = vpow.pop %v2042
        %v2044 = vmul.f32 %v2024, 1.442695
        %v2045 = vpow.pop %v2044
        %v2046 = vmul.f32 %v2025, 1.442695
        %v2047 = vpow.pop %v2046
        %v2048 = vmul.f32 %v2026, 1.442695
        %v2049 = vpow.pop %v2048
        %v2050 = vmul.f32 %v2027, 1.442695
        %v2051 = vpow.pop %v2050
        %v2052 = vmul.f32 %v2028, 1.442695
        %v2053 = vpow.pop %v2052
        %v2054 = vmul.f32 %v2029, 1.442695
        %v2055 = vpow.pop %v2054
        %v2056 = vmul.f32 %v2030, 1.442695
        %v2057 = vpow.pop %v2056
        %v2058 = vmul.f32 %v2031, 1.442695
        %v2059 = vpow.pop %v2058
        %v2060 = vmul.f32 %v2032, 1.442695
        %v2061 = vpow.pop %v2060
        %v2062 = vmul.f32 %v2033, 1.442695
        %v2063 = vpow.pop %v2062
        %v2064 = vmul.f32 %v2034, 1.442695
        %v2065 = vpow.pop %v2064
        %v2066 = vmul.f32 %v2035, 1.442695
        %v2067 = vpow.pop %v2066
        %v2068 = vadd.f32 %v2037, 1.0
        %v2069 = vadd.f32 %v2039, 1.0
        %v2070 = vadd.f32 %v2041, 1.0
        %v2071 = vadd.f32 %v2043, 1.0
        %v2072 = vadd.f32 %v2045, 1.0
        %v2073 = vadd.f32 %v2047, 1.0
        %v2074 = vadd.f32 %v2049, 1.0
        %v2075 = vadd.f32 %v2051, 1.0
        %v2076 = vadd.f32 %v2053, 1.0
        %v2077 = vadd.f32 %v2055, 1.0
        %v2078 = vadd.f32 %v2057, 1.0
        %v2079 = vadd.f32 %v2059, 1.0
        %v2080 = vadd.f32 %v2061, 1.0
        %v2081 = vadd.f32 %v2063, 1.0
        %v2082 = vadd.f32 %v2065, 1.0
        %v2083 = vadd.f32 %v2067, 1.0
        %v2084 = vrcp.pop %v2068
        %v2085 = vmul.f32 1.0, %v2084
        %v2086 = vrcp.pop %v2069
        %v2087 = vmul.f32 1.0, %v2086
        %v2088 = vrcp.pop %v2070
        %v2089 = vmul.f32 1.0, %v2088
        %v2090 = vrcp.pop %v2071
        %v2091 = vmul.f32 1.0, %v2090
        %v2092 = vrcp.pop %v2072
        %v2093 = vmul.f32 1.0, %v2092
        %v2094 = vrcp.pop %v2073
        %v2095 = vmul.f32 1.0, %v2094
        %v2096 = vrcp.pop %v2074
        %v2097 = vmul.f32 1.0, %v2096
        %v2098 = vrcp.pop %v2075
        %v2099 = vmul.f32 1.0, %v2098
        %v2100 = vrcp.pop %v2076
        %v2101 = vmul.f32 1.0, %v2100
        %v2102 = vrcp.pop %v2077
        %v2103 = vmul.f32 1.0, %v2102
        %v2104 = vrcp.pop %v2078
        %v2105 = vmul.f32 1.0, %v2104
        %v2106 = vrcp.pop %v2079
        %v2107 = vmul.f32 1.0, %v2106
        %v2108 = vrcp.pop %v2080
        %v2109 = vmul.f32 1.0, %v2108
        %v2110 = vrcp.pop %v2081
        %v2111 = vmul.f32 1.0, %v2110
        %v2112 = vrcp.pop %v2082
        %v2113 = vmul.f32 1.0, %v2112
        %v2114 = vrcp.pop %v2083
        %v2115 = vmul.f32 1.0, %v2114
        %v2116 = vmul.f32 %v1973, %v1814
        %v2117 = vmul.f32 %v1975, %v1819
        %v2118 = vmul.f32 %v1977, %v1824
        %v2119 = vmul.f32 %v1979, %v1829
        %v2120 = vmul.f32 %v1981, %v1834
        %v2121 = vmul.f32 %v1983, %v1839
        %v2122 = vmul.f32 %v1985, %v1844
        %v2123 = vmul.f32 %v1987, %v1849
        %v2124 = vmul.f32 %v1989, %v1854
        %v2125 = vmul.f32 %v1991, %v1859
        %v2126 = vmul.f32 %v1993, %v1864
        %v2127 = vmul.f32 %v1995, %v1869
        %v2128 = vmul.f32 %v1997, %v1874
        %v2129 = vmul.f32 %v1999, %v1879
        %v2130 = vmul.f32 %v2001, %v1884
        %v2131 = vmul.f32 %v2003, %v1889
        %v2132 = vadd.f32 %v1443, %v2116
        %v2133 = vadd.f32 %v1448, %v2117
        %v2134 = vadd.f32 %v1453, %v2118
        %v2135 = vadd.f32 %v1458, %v2119
        %v2136 = vadd.f32 %v1463, %v2120
        %v2137 = vadd.f32 %v1468, %v2121
        %v2138 = vadd.f32 %v1473, %v2122
        %v2139 = vadd.f32 %v1478, %v2123
        %v2140 = vadd.f32 %v1483, %v2124
        %v2141 = vadd.f32 %v1488, %v2125
        %v2142 = vadd.f32 %v1493, %v2126
        %v2143 = vadd.f32 %v1498, %v2127
        %v2144 = vadd.f32 %v1503, %v2128
        %v2145 = vadd.f32 %v1508, %v2129
        %v2146 = vadd.f32 %v1513, %v2130
        %v2147 = vadd.f32 %v1518, %v2131
        %v2148 = vtanh.pop %v2132
        %v2149 = vtanh.pop %v2133
        %v2150 = vtanh.pop %v2134
        %v2151 = vtanh.pop %v2135
        %v2152 = vtanh.pop %v2136
        %v2153 = vtanh.pop %v2137
        %v2154 = vtanh.pop %v2138
        %v2155 = vtanh.pop %v2139
        %v2156 = vtanh.pop %v2140
        %v2157 = vtanh.pop %v2141
        %v2158 = vtanh.pop %v2142
        %v2159 = vtanh.pop %v2143
        %v2160 = vtanh.pop %v2144
        %v2161 = vtanh.pop %v2145
        %v2162 = vtanh.pop %v2146
        %v2163 = vtanh.pop %v2147
        %v2164 = vsub.f32 1.0, %v2085
        %v2165 = vsub.f32 1.0, %v2087
        %v2166 = vsub.f32 1.0, %v2089
        %v2167 = vsub.f32 1.0, %v2091
        %v2168 = vsub.f32 1.0, %v2093
        %v2169 = vsub.f32 1.0, %v2095
        %v2170 = vsub.f32 1.0, %v2097
        %v2171 = vsub.f32 1.0, %v2099
        %v2172 = vsub.f32 1.0, %v2101
        %v2173 = vsub.f32 1.0, %v2103
        %v2174 = vsub.f32 1.0, %v2105
        %v2175 = vsub.f32 1.0, %v2107
        %v2176 = vsub.f32 1.0, %v2109
        %v2177 = vsub.f32 1.0, %v2111
        %v2178 = vsub.f32 1.0, %v2113
        %v2179 = vsub.f32 1.0, %v2115
        %v2180 = vmul.f32 %v2164, %v2148
        %v2181 = vmul.f32 %v2165, %v2149
        %v2182 = vmul.f32 %v2166, %v2150
        %v2183 = vmul.f32 %v2167, %v2151
        %v2184 = vmul.f32 %v2168, %v2152
        %v2185 = vmul.f32 %v2169, %v2153
        %v2186 = vmul.f32 %v2170, %v2154
        %v2187 = vmul.f32 %v2171, %v2155
        %v2188 = vmul.f32 %v2172, %v2156
        %v2189 = vmul.f32 %v2173, %v2157
        %v2190 = vmul.f32 %v2174, %v2158
        %v2191 = vmul.f32 %v2175, %v2159
        %v2192 = vmul.f32 %v2176, %v2160
        %v2193 = vmul.f32 %v2177, %v2161
        %v2194 = vmul.f32 %v2178, %v2162
        %v2195 = vmul.f32 %v2179, %v2163
        %v2196 = vmul.f32 %v2085, %v530
        %v2197 = vmul.f32 %v2087, %v531
        %v2198 = vmul.f32 %v2089, %v532
        %v2199 = vmul.f32 %v2091, %v533
        %v2200 = vmul.f32 %v2093, %v534
        %v2201 = vmul.f32 %v2095, %v535
        %v2202 = vmul.f32 %v2097, %v536
        %v2203 = vmul.f32 %v2099, %v537
        %v2204 = vmul.f32 %v2101, %v538
        %v2205 = vmul.f32 %v2103, %v539
        %v2206 = vmul.f32 %v2105, %v540
        %v2207 = vmul.f32 %v2107, %v541
        %v2208 = vmul.f32 %v2109, %v542
        %v2209 = vmul.f32 %v2111, %v543
        %v2210 = vmul.f32 %v2113, %v544
        %v2211 = vmul.f32 %v2115, %v545
        %v2212 = vadd.f32 %v2180, %v2196
        %v2213 = vadd.f32 %v2181, %v2197
        %v2214 = vadd.f32 %v2182, %v2198
        %v2215 = vadd.f32 %v2183, %v2199
        %v2216 = vadd.f32 %v2184, %v2200
        %v2217 = vadd.f32 %v2185, %v2201
        %v2218 = vadd.f32 %v2186, %v2202
        %v2219 = vadd.f32 %v2187, %v2203
        %v2220 = vadd.f32 %v2188, %v2204
        %v2221 = vadd.f32 %v2189, %v2205
        %v2222 = vadd.f32 %v2190, %v2206
        %v2223 = vadd.f32 %v2191, %v2207
        %v2224 = vadd.f32 %v2192, %v2208
        %v2225 = vadd.f32 %v2193, %v2209
        %v2226 = vadd.f32 %v2194, %v2210
        %v2227 = vadd.f32 %v2195, %v2211
        %v2228 = vmax.f32 %v2212, 0.0
        %v2229 = vmax.f32 %v2213, 0.0
        %v2230 = vmax.f32 %v2214, 0.0
        %v2231 = vmax.f32 %v2215, 0.0
        %v2232 = vmax.f32 %v2216, 0.0
        %v2233 = vmax.f32 %v2217, 0.0
        %v2234 = vmax.f32 %v2218, 0.0
        %v2235 = vmax.f32 %v2219, 0.0
        %v2236 = vmax.f32 %v2220, 0.0
        %v2237 = vmax.f32 %v2221, 0.0
        %v2238 = vmax.f32 %v2222, 0.0
        %v2239 = vmax.f32 %v2223, 0.0
        %v2240 = vmax.f32 %v2224, 0.0
        %v2241 = vmax.f32 %v2225, 0.0
        %v2242 = vmax.f32 %v2226, 0.0
        %v2243 = vmax.f32 %v2227, 0.0
        %v2244 = vld [vmem:[%s9] sm:$0x1]
        %v2246 = vlaneseq
        %v2247 = vshrl.u32 %v2246, 7
        %v2248 = vsub.s32 0, %v2247
        %v2249 = vrot.slane %v2244, %v2248
        %v2251 = vmul.f32 %v2228, %v2249
        %v2252 = vmul.f32 %v2229, %v2249
        %v2253 = vmul.f32 %v2230, %v2249
        %v2254 = vmul.f32 %v2231, %v2249
        %v2255 = vmul.f32 %v2232, %v2249
        %v2256 = vmul.f32 %v2233, %v2249
        %v2257 = vmul.f32 %v2234, %v2249
        %v2258 = vmul.f32 %v2235, %v2249
        %v2259 = vmul.f32 %v2236, %v2249
        %v2260 = vmul.f32 %v2237, %v2249
        %v2261 = vmul.f32 %v2238, %v2249
        %v2262 = vmul.f32 %v2239, %v2249
        %v2263 = vmul.f32 %v2240, %v2249
        %v2264 = vmul.f32 %v2241, %v2249
        %v2265 = vmul.f32 %v2242, %v2249
        %v2266 = vmul.f32 %v2243, %v2249
        %v2267 = vld [vmem:[%s10] sm:$0x1]
        %v2269 = vlaneseq
        %v2270 = vshrl.u32 %v2269, 7
        %v2271 = vsub.s32 0, %v2270
        %v2272 = vrot.slane %v2267, %v2271
        %v2274 = vadd.f32 %v2251, %v2272
        %v2275 = vadd.f32 %v2252, %v2272
        %v2276 = vadd.f32 %v2253, %v2272
        %v2277 = vadd.f32 %v2254, %v2272
        %v2278 = vadd.f32 %v2255, %v2272
        %v2279 = vadd.f32 %v2256, %v2272
        %v2280 = vadd.f32 %v2257, %v2272
        %v2281 = vadd.f32 %v2258, %v2272
        %v2282 = vadd.f32 %v2259, %v2272
        %v2283 = vadd.f32 %v2260, %v2272
        %v2284 = vadd.f32 %v2261, %v2272
        %v2285 = vadd.f32 %v2262, %v2272
        %v2286 = vadd.f32 %v2263, %v2272
        %v2287 = vadd.f32 %v2264, %v2272
        %v2288 = vadd.f32 %v2265, %v2272
        %v2289 = vadd.f32 %v2266, %v2272
        %2290 = vst [vmem:[%s525] sm:$0xff] %v2274
        %2291 = vst [vmem:[%s525 + $0x8] sm:$0xff] %v2275
        %2292 = vst [vmem:[%s525 + $0x10] sm:$0xff] %v2276
        %2293 = vst [vmem:[%s525 + $0x18] sm:$0xff] %v2277
        %2294 = vst [vmem:[%s525 + $0x20] sm:$0xff] %v2278
        %2295 = vst [vmem:[%s525 + $0x28] sm:$0xff] %v2279
        %2296 = vst [vmem:[%s525 + $0x30] sm:$0xff] %v2280
        %2297 = vst [vmem:[%s525 + $0x38] sm:$0xff] %v2281
        %2298 = vst [vmem:[%s525 + $0x40] sm:$0xff] %v2282
        %2299 = vst [vmem:[%s525 + $0x48] sm:$0xff] %v2283
        %2300 = vst [vmem:[%s525 + $0x50] sm:$0xff] %v2284
        %2301 = vst [vmem:[%s525 + $0x58] sm:$0xff] %v2285
        %2302 = vst [vmem:[%s525 + $0x60] sm:$0xff] %v2286
        %2303 = vst [vmem:[%s525 + $0x68] sm:$0xff] %v2287
        %2304 = vst [vmem:[%s525 + $0x70] sm:$0xff] %v2288
        %2305 = vst [vmem:[%s525 + $0x78] sm:$0xff] %v2289
        %s2306 = sand.u32 %s287, 1
        %s2307 = scalar_lea.sflag [#allocation4], %s2306
        %s2308 = sand.u32 %s287, 1
        %s2309 = smul.addr %s2308, 128
        %s2310 = scalar_lea.vmem [#allocation13], %s2309
        // Predicated region
        $region89: #{tpu_custom_call.1} parent=63 // pred_check
          %p2311 = pneg %p297
        $region90: #{tpu_custom_call.1} parent=63 // pred_check_branch
          %2313 = sbr.rel (%p2311) target = $region92
        $region91: #{tpu_custom_call.1} parent=63 // pred_region
          %s2314 = smul.u32 16, %s33
          %s2316 = ssub.s32 2048, 2048
          %2317 = vsyncadd %s2307, %s2316
          %s2318 = smul.addr %s2314, 128
          %s2319 = scalar_lea.hbm %s11, %s2318
          %s2320 = sshll.u32 %s2310, 4
          %s2321 = int_to_ptr.vmem [resolvable:$true] %s2320
          %2326 = dma.vmem_to_hbm [thread:$0]  %s2321, 2048, %s2319, %s2307, 128, 128, 8
        $region92: #{tpu_custom_call.1} parent=63 // pred_fallthru
          _
      $region64: #{tpu_custom_call.1} parent=5 // pred_fallthru
        _
      %p2327 = scmp.le.s32.totalorder 2, %s28
      // Predicated region
      $region93: #{tpu_custom_call.1} parent=5 // pred_check
        %p2328 = pneg %p2327
      $region94: #{tpu_custom_call.1} parent=5 // pred_check_branch
        %2330 = sbr.rel (%p2328) target = $region96
      $region95: #{tpu_custom_call.1} parent=5 // pred_region
        %s2331 = ssub.s32 %s28, 2
        // Predicated region
        $region97: #{tpu_custom_call.1} parent=95 // pred_check
          %p2332 = pneg %p303
        $region98: #{tpu_custom_call.1} parent=95 // pred_check_branch
          %2334 = sbr.rel (%p2332) target = $region100
        $region99: #{tpu_custom_call.1} parent=95 // pred_region
          %s2335 = sand.u32 %s288, 1
          %s2336 = scalar_lea.sflag [#allocation4], %s2335
          %s2337 = sand.u32 %s288, 1
          %s2338 = smul.addr %s2337, 128
          %s2339 = scalar_lea.vmem [#allocation13], %s2338
          %2340 = dma.done %s2336, 2048
        $region100: #{tpu_custom_call.1} parent=95 // pred_fallthru
          _
      $region96: #{tpu_custom_call.1} parent=5 // pred_fallthru
        _
    $region6: #{tpu_custom_call.1} parent=1 // loop_footer
      %s32 = sadd.s32 1, %s28
    $region7: #{tpu_custom_call.1} parent=1 // loop_footer_branch
      %27 = sbr.rel target = $region3
    $region8: #{tpu_custom_call.1} parent=1 // loop_exit
      _
    %2341 = vsyncpa [#allocation3], 1
    %s2342 = scalar_lea.sflag [#allocation3], 1
    %2343 = vsyncpa %s2342, 1
    %2344 = vsyncpa [#allocation6], 1
    %s2345 = scalar_lea.sflag [#allocation6], 1
    %2346 = vsyncpa %s2345, 1
    %2347 = vsyncpa [#allocation9], 1
    %2348 = vsyncpa [#allocation12], 1
    %2349 = vsyncpa [#allocation4], 1
    %s2350 = scalar_lea.sflag [#allocation4], 1
    %2351 = vsyncpa %s2350, 1

</llo_original>
